<compile_context>
chip_gen: v7x
topology: tpu7x:2x2x1
jax: 0.10.0
libtpu: 0.0.40
codegen_flags: <defaults>
</compile_context>

<pallas_src>
import functools

import jax
import jax.numpy as jnp
from jax.experimental import pallas as pl
from jax.experimental.pallas import tpu as pltpu


def _round_up(x, m):
    return ((x + m - 1) // m) * m


def _molecular_gcn_kernel(n_layers, x_ref, a_ref, w0_ref, *rest):
    """rest = (w, b, wr, br) * n_layers + (o_ref,). One grid step = one graph."""
    o_ref = rest[-1]
    layer_refs = rest[:-1]

    x = x_ref[0]          # [M, F_pad]  node features of this graph
    a = a_ref[0]          # [M, M]      dense adjacency of this graph

    # init_transform: Linear without bias (last embedding channel is zeroed
    # in the weights, matching the padding=True branch).
    h = jnp.dot(x, w0_ref[...], preferred_element_type=jnp.float32)      # [M, C]

    for l in range(n_layers):
        w, b, wr, br = layer_refs[4 * l: 4 * l + 4]
        # GraphConv(norm='none'): aggregate in-neighbours, project, bias, ReLU.
        msg = jnp.dot(a, h, preferred_element_type=jnp.float32)          # [M, C_in]
        conv = jnp.dot(msg, w[...], preferred_element_type=jnp.float32) + b[...]
        conv = jnp.maximum(conv, 0.0)
        # Residual branch (dgllife default residual=True): ReLU(Linear(h)).
        res = jnp.dot(h, wr[...], preferred_element_type=jnp.float32) + br[...]
        res = jnp.maximum(res, 0.0)
        # dropout=0.0 and batchnorm=False (dgllife defaults) -> identity here.
        h = conv + res

    o_ref[0] = h.astype(o_ref.dtype)


def molecular_gcn(node_feats, adj, params):
    """node_feats: [B, M, in_feats] f32, adj: [B, M, M] f32 dense adjacency.

    Returns [B, M, C] with C = hidden_feats[-1]  (== the module's
    node_feats.view(batch_size, -1, self.output_feats)).
    """
    B, M, F = node_feats.shape
    C = params["w_init"].shape[1]
    n_layers = len(params["layers"])

    # Lane/sublane-friendly padding: feature dim -> multiple of 128 (lanes),
    # node dim -> multiple of 8 (sublanes). Padded rows/cols are all-zero, so
    # they cannot perturb real nodes; they are sliced off at the end.
    F_pad = _round_up(F, 128)
    M_pad = _round_up(max(M, 8), 8)

    x = jnp.pad(node_feats, ((0, 0), (0, M_pad - M), (0, F_pad - F)))
    a = jnp.pad(adj, ((0, 0), (0, M_pad - M), (0, M_pad - M)))
    w0 = jnp.pad(params["w_init"], ((0, F_pad - F), (0, 0)))

    args = [x, a, w0]
    for (w, b, wr, br) in params["layers"]:
        args += [w, b, wr, br]

    # Weights/biases: constant index_map -> resident in VMEM across the whole
    # (parallel) graph axis, no re-DMA. Per-graph tensors stream block by block.
    const2d = lambda g: (0, 0)
    in_specs = [
        pl.BlockSpec((1, M_pad, F_pad), lambda g: (g, 0, 0)),   # node feats
        pl.BlockSpec((1, M_pad, M_pad), lambda g: (g, 0, 0)),   # adjacency
        pl.BlockSpec(w0.shape, const2d),                        # init weight
    ]
    for (w, b, wr, br) in params["layers"]:
        in_specs += [
            pl.BlockSpec(w.shape, const2d),
            pl.BlockSpec(b.shape, const2d),
            pl.BlockSpec(wr.shape, const2d),
            pl.BlockSpec(br.shape, const2d),
        ]

    out = pl.pallas_call(
        functools.partial(_molecular_gcn_kernel, n_layers),
        out_shape=jax.ShapeDtypeStruct((B, M_pad, C), jnp.float32),
        grid=(B,),
        in_specs=in_specs,
        out_specs=pl.BlockSpec((1, M_pad, C), lambda g: (g, 0, 0)),
        compiler_params=pltpu.CompilerParams(
            # graphs are independent -> shard the grid across v7x's 2 TensorCores
            dimension_semantics=("parallel",),
            # safe on v5e (128 MiB phys), v6e (128 MiB) and v7x (64 MiB phys)
            vmem_limit_bytes=32 * 1024 * 1024,
        ),
    )(*args)

    return out[:, :M, :]


def init_params(key, in_feats, dim_embedding=128, hidden_feats=(128, 128, 128)):
    """Synthetic parameters matching MolecularGCN.__init__ shapes.

    Linear weights are stored pre-transposed as [in_features, out_features].
    init_transform has no bias and its LAST output channel's weights are zeroed
    (the `padding=True` branch: weight[-1].fill_(0)). Each GCN layer has a
    GraphConv weight/bias plus a residual-Linear weight/bias (dgllife defaults).
    Biases are pre-shaped (1, C) so no in-kernel reshape is needed.
    """
    n_layers = len(hidden_feats)
    keys = jax.random.split(key, 1 + 4 * n_layers)

    def uniform(k, shape, fan_in):
        bound = 1.0 / jnp.sqrt(jnp.float32(fan_in))
        return jax.random.uniform(k, shape, jnp.float32, -bound, bound)

    w_init = uniform(keys[0], (in_feats, dim_embedding), in_feats)
    w_init = w_init.at[:, -1].set(0.0)   # padding=True: zero last embedding channel

    layers = []
    dims = [dim_embedding] + list(hidden_feats)
    for l in range(n_layers):
        fi, fo = dims[l], dims[l + 1]
        k = keys[1 + 4 * l: 1 + 4 * (l + 1)]
        layers.append((
            uniform(k[0], (fi, fo), fi),      # GraphConv weight
            uniform(k[1], (1, fo), fi),       # GraphConv bias
            uniform(k[2], (fi, fo), fi),      # residual Linear weight
            uniform(k[3], (1, fo), fi),       # residual Linear bias
        ))

    return {"w_init": w_init, "layers": layers}


def molecular_gcn_ref(node_feats, adj, params):
    """Pure-JAX reference mirroring the PyTorch forward."""
    h = jnp.einsum("bmf,fc->bmc", node_feats, params["w_init"])
    for (w, b, wr, br) in params["layers"]:
        msg = jnp.einsum("bmn,bnc->bmc", adj, h)
        conv = jnp.maximum(jnp.einsum("bmc,cd->bmd", msg, w) + b, 0.0)
        res = jnp.maximum(jnp.einsum("bmc,cd->bmd", h, wr) + br, 0.0)
        h = conv + res
    return h


if __name__ == "__main__":
    key = jax.random.PRNGKey(0)
    k_x, k_a, k_p = jax.random.split(key, 3)

    # 2 graphs in the batch, each padded to 16 nodes, 30 raw atom features.
    B, M, IN_FEATS = 2, 16, 30
    DIM_EMB, HIDDEN = 128, (128, 128, 128)

    node_feats = jax.random.normal(k_x, (B, M, IN_FEATS), jnp.float32)

    # Deterministic random symmetric 0/1 adjacency with self-loops
    # (dense stand-in for the DGL batched graph, block per graph).
    rnd = jax.random.bernoulli(k_a, 0.2, (B, M, M))
    adj = jnp.maximum(rnd, jnp.swapaxes(rnd, 1, 2)).astype(jnp.float32)
    adj = jnp.maximum(adj, jnp.eye(M, dtype=jnp.float32)[None])

    params = init_params(k_p, IN_FEATS, DIM_EMB, HIDDEN)

    out = molecular_gcn(node_feats, adj, params)
    out = jax.block_until_ready(out)

    ref = molecular_gcn_ref(node_feats, adj, params)
    assert out.shape == (B, M, HIDDEN[-1])
    assert jnp.allclose(out, ref, atol=1e-2, rtol=1e-2), "mismatch vs reference"

    print("KERNEL_OK")
</pallas_src>

<mosaic_0001>
module attributes {stable_mosaic.version = 11 : i64} {
  func.func @_molecular_gcn_kernel(%arg0: i32, %arg1: memref<1x16x128xf32, #tpu.memory_space<vmem>>, %arg2: memref<1x16x16xf32, #tpu.memory_space<vmem>>, %arg3: memref<128x128xf32, #tpu.memory_space<vmem>>, %arg4: memref<128x128xf32, #tpu.memory_space<vmem>>, %arg5: memref<1x128xf32, #tpu.memory_space<vmem>>, %arg6: memref<128x128xf32, #tpu.memory_space<vmem>>, %arg7: memref<1x128xf32, #tpu.memory_space<vmem>>, %arg8: memref<128x128xf32, #tpu.memory_space<vmem>>, %arg9: memref<1x128xf32, #tpu.memory_space<vmem>>, %arg10: memref<128x128xf32, #tpu.memory_space<vmem>>, %arg11: memref<1x128xf32, #tpu.memory_space<vmem>>, %arg12: memref<128x128xf32, #tpu.memory_space<vmem>>, %arg13: memref<1x128xf32, #tpu.memory_space<vmem>>, %arg14: memref<128x128xf32, #tpu.memory_space<vmem>>, %arg15: memref<1x128xf32, #tpu.memory_space<vmem>>, %arg16: memref<1x16x128xf32, #tpu.memory_space<vmem>>) attributes {dimension_semantics = [#tpu.dimension_semantics<parallel>], iteration_bounds = array<i64: 2>, scalar_prefetch = 0 : i64, scratch_operands = 0 : i64, tpu.core_type = #tpu.core_type<tc>, window_params = [{transform_indices = @transform_0, window_bounds = array<i64: 1, 16, 128>}, {transform_indices = @transform_1, window_bounds = array<i64: 1, 16, 16>}, {pipeline_mode = #tpu.pipeline_mode<synchronous>, transform_indices = @transform_2, window_bounds = array<i64: 128, 128>}, {pipeline_mode = #tpu.pipeline_mode<synchronous>, transform_indices = @transform_3, window_bounds = array<i64: 128, 128>}, {pipeline_mode = #tpu.pipeline_mode<synchronous>, transform_indices = @transform_4, window_bounds = array<i64: 1, 128>}, {pipeline_mode = #tpu.pipeline_mode<synchronous>, transform_indices = @transform_5, window_bounds = array<i64: 128, 128>}, {pipeline_mode = #tpu.pipeline_mode<synchronous>, transform_indices = @transform_6, window_bounds = array<i64: 1, 128>}, {pipeline_mode = #tpu.pipeline_mode<synchronous>, transform_indices = @transform_7, window_bounds = array<i64: 128, 128>}, {pipeline_mode = #tpu.pipeline_mode<synchronous>, transform_indices = @transform_8, window_bounds = array<i64: 1, 128>}, {pipeline_mode = #tpu.pipeline_mode<synchronous>, transform_indices = @transform_9, window_bounds = array<i64: 128, 128>}, {pipeline_mode = #tpu.pipeline_mode<synchronous>, transform_indices = @transform_10, window_bounds = array<i64: 1, 128>}, {pipeline_mode = #tpu.pipeline_mode<synchronous>, transform_indices = @transform_11, window_bounds = array<i64: 128, 128>}, {pipeline_mode = #tpu.pipeline_mode<synchronous>, transform_indices = @transform_12, window_bounds = array<i64: 1, 128>}, {pipeline_mode = #tpu.pipeline_mode<synchronous>, transform_indices = @transform_13, window_bounds = array<i64: 128, 128>}, {pipeline_mode = #tpu.pipeline_mode<synchronous>, transform_indices = @transform_14, window_bounds = array<i64: 1, 128>}, {transform_indices = @transform_15, window_bounds = array<i64: 1, 16, 128>}]} {
    %c0 = arith.constant 0 : index
    %c0_0 = arith.constant 0 : index
    %c0_1 = arith.constant 0 : index
    %0 = vector.load %arg1[%c0, %c0_0, %c0_1] : memref<1x16x128xf32, #tpu.memory_space<vmem>>, vector<1x16x128xf32>
    %1 = vector.shape_cast %0 : vector<1x16x128xf32> to vector<16x128xf32>
    %c0_2 = arith.constant 0 : index
    %c0_3 = arith.constant 0 : index
    %c0_4 = arith.constant 0 : index
    %2 = vector.load %arg2[%c0_2, %c0_3, %c0_4] : memref<1x16x16xf32, #tpu.memory_space<vmem>>, vector<1x16x16xf32>
    %3 = vector.shape_cast %2 : vector<1x16x16xf32> to vector<16x16xf32>
    %c0_5 = arith.constant 0 : index
    %c0_6 = arith.constant 0 : index
    %4 = vector.load %arg3[%c0_5, %c0_6] : memref<128x128xf32, #tpu.memory_space<vmem>>, vector<128x128xf32>
    %cst = arith.constant dense<0.000000e+00> : vector<16x128xf32>
    %5 = tpu.matmul %1, %4, %cst {dimension_numbers = #tpu.dot_dimension_numbers<[1], [0], [0], [1], [0, 0, 1, 1], [], []>} : vector<16x128xf32>, vector<128x128xf32>, vector<16x128xf32> -> vector<16x128xf32>
    %cst_7 = arith.constant dense<0.000000e+00> : vector<16x128xf32>
    %6 = tpu.matmul %3, %5, %cst_7 {dimension_numbers = #tpu.dot_dimension_numbers<[1], [0], [0], [1], [0, 0, 1, 1], [], []>} : vector<16x16xf32>, vector<16x128xf32>, vector<16x128xf32> -> vector<16x128xf32>
    %c0_8 = arith.constant 0 : index
    %c0_9 = arith.constant 0 : index
    %7 = vector.load %arg4[%c0_8, %c0_9] : memref<128x128xf32, #tpu.memory_space<vmem>>, vector<128x128xf32>
    %cst_10 = arith.constant dense<0.000000e+00> : vector<16x128xf32>
    %8 = tpu.matmul %6, %7, %cst_10 {dimension_numbers = #tpu.dot_dimension_numbers<[1], [0], [0], [1], [0, 0, 1, 1], [], []>} : vector<16x128xf32>, vector<128x128xf32>, vector<16x128xf32> -> vector<16x128xf32>
    %c0_11 = arith.constant 0 : index
    %c0_12 = arith.constant 0 : index
    %9 = vector.load %arg5[%c0_11, %c0_12] : memref<1x128xf32, #tpu.memory_space<vmem>>, vector<1x128xf32>
    %10 = vector.broadcast %9 : vector<1x128xf32> to vector<16x128xf32>
    %11 = arith.addf %8, %10 : vector<16x128xf32>
    %cst_13 = arith.constant 0.000000e+00 : f32
    %12 = vector.broadcast %cst_13 : f32 to vector<16x128xf32>
    %13 = arith.maximumf %11, %12 : vector<16x128xf32>
    %c0_14 = arith.constant 0 : index
    %c0_15 = arith.constant 0 : index
    %14 = vector.load %arg6[%c0_14, %c0_15] : memref<128x128xf32, #tpu.memory_space<vmem>>, vector<128x128xf32>
    %cst_16 = arith.constant dense<0.000000e+00> : vector<16x128xf32>
    %15 = tpu.matmul %5, %14, %cst_16 {dimension_numbers = #tpu.dot_dimension_numbers<[1], [0], [0], [1], [0, 0, 1, 1], [], []>} : vector<16x128xf32>, vector<128x128xf32>, vector<16x128xf32> -> vector<16x128xf32>
    %c0_17 = arith.constant 0 : index
    %c0_18 = arith.constant 0 : index
    %16 = vector.load %arg7[%c0_17, %c0_18] : memref<1x128xf32, #tpu.memory_space<vmem>>, vector<1x128xf32>
    %17 = vector.broadcast %16 : vector<1x128xf32> to vector<16x128xf32>
    %18 = arith.addf %15, %17 : vector<16x128xf32>
    %cst_19 = arith.constant 0.000000e+00 : f32
    %19 = vector.broadcast %cst_19 : f32 to vector<16x128xf32>
    %20 = arith.maximumf %18, %19 : vector<16x128xf32>
    %21 = arith.addf %13, %20 : vector<16x128xf32>
    %cst_20 = arith.constant dense<0.000000e+00> : vector<16x128xf32>
    %22 = tpu.matmul %3, %21, %cst_20 {dimension_numbers = #tpu.dot_dimension_numbers<[1], [0], [0], [1], [0, 0, 1, 1], [], []>} : vector<16x16xf32>, vector<16x128xf32>, vector<16x128xf32> -> vector<16x128xf32>
    %c0_21 = arith.constant 0 : index
    %c0_22 = arith.constant 0 : index
    %23 = vector.load %arg8[%c0_21, %c0_22] : memref<128x128xf32, #tpu.memory_space<vmem>>, vector<128x128xf32>
    %cst_23 = arith.constant dense<0.000000e+00> : vector<16x128xf32>
    %24 = tpu.matmul %22, %23, %cst_23 {dimension_numbers = #tpu.dot_dimension_numbers<[1], [0], [0], [1], [0, 0, 1, 1], [], []>} : vector<16x128xf32>, vector<128x128xf32>, vector<16x128xf32> -> vector<16x128xf32>
    %c0_24 = arith.constant 0 : index
    %c0_25 = arith.constant 0 : index
    %25 = vector.load %arg9[%c0_24, %c0_25] : memref<1x128xf32, #tpu.memory_space<vmem>>, vector<1x128xf32>
    %26 = vector.broadcast %25 : vector<1x128xf32> to vector<16x128xf32>
    %27 = arith.addf %24, %26 : vector<16x128xf32>
    %cst_26 = arith.constant 0.000000e+00 : f32
    %28 = vector.broadcast %cst_26 : f32 to vector<16x128xf32>
    %29 = arith.maximumf %27, %28 : vector<16x128xf32>
    %c0_27 = arith.constant 0 : index
    %c0_28 = arith.constant 0 : index
    %30 = vector.load %arg10[%c0_27, %c0_28] : memref<128x128xf32, #tpu.memory_space<vmem>>, vector<128x128xf32>
    %cst_29 = arith.constant dense<0.000000e+00> : vector<16x128xf32>
    %31 = tpu.matmul %21, %30, %cst_29 {dimension_numbers = #tpu.dot_dimension_numbers<[1], [0], [0], [1], [0, 0, 1, 1], [], []>} : vector<16x128xf32>, vector<128x128xf32>, vector<16x128xf32> -> vector<16x128xf32>
    %c0_30 = arith.constant 0 : index
    %c0_31 = arith.constant 0 : index
    %32 = vector.load %arg11[%c0_30, %c0_31] : memref<1x128xf32, #tpu.memory_space<vmem>>, vector<1x128xf32>
    %33 = vector.broadcast %32 : vector<1x128xf32> to vector<16x128xf32>
    %34 = arith.addf %31, %33 : vector<16x128xf32>
    %cst_32 = arith.constant 0.000000e+00 : f32
    %35 = vector.broadcast %cst_32 : f32 to vector<16x128xf32>
    %36 = arith.maximumf %34, %35 : vector<16x128xf32>
    %37 = arith.addf %29, %36 : vector<16x128xf32>
    %cst_33 = arith.constant dense<0.000000e+00> : vector<16x128xf32>
    %38 = tpu.matmul %3, %37, %cst_33 {dimension_numbers = #tpu.dot_dimension_numbers<[1], [0], [0], [1], [0, 0, 1, 1], [], []>} : vector<16x16xf32>, vector<16x128xf32>, vector<16x128xf32> -> vector<16x128xf32>
    %c0_34 = arith.constant 0 : index
    %c0_35 = arith.constant 0 : index
    %39 = vector.load %arg12[%c0_34, %c0_35] : memref<128x128xf32, #tpu.memory_space<vmem>>, vector<128x128xf32>
    %cst_36 = arith.constant dense<0.000000e+00> : vector<16x128xf32>
    %40 = tpu.matmul %38, %39, %cst_36 {dimension_numbers = #tpu.dot_dimension_numbers<[1], [0], [0], [1], [0, 0, 1, 1], [], []>} : vector<16x128xf32>, vector<128x128xf32>, vector<16x128xf32> -> vector<16x128xf32>
    %c0_37 = arith.constant 0 : index
    %c0_38 = arith.constant 0 : index
    %41 = vector.load %arg13[%c0_37, %c0_38] : memref<1x128xf32, #tpu.memory_space<vmem>>, vector<1x128xf32>
    %42 = vector.broadcast %41 : vector<1x128xf32> to vector<16x128xf32>
    %43 = arith.addf %40, %42 : vector<16x128xf32>
    %cst_39 = arith.constant 0.000000e+00 : f32
    %44 = vector.broadcast %cst_39 : f32 to vector<16x128xf32>
    %45 = arith.maximumf %43, %44 : vector<16x128xf32>
    %c0_40 = arith.constant 0 : index
    %c0_41 = arith.constant 0 : index
    %46 = vector.load %arg14[%c0_40, %c0_41] : memref<128x128xf32, #tpu.memory_space<vmem>>, vector<128x128xf32>
    %cst_42 = arith.constant dense<0.000000e+00> : vector<16x128xf32>
    %47 = tpu.matmul %37, %46, %cst_42 {dimension_numbers = #tpu.dot_dimension_numbers<[1], [0], [0], [1], [0, 0, 1, 1], [], []>} : vector<16x128xf32>, vector<128x128xf32>, vector<16x128xf32> -> vector<16x128xf32>
    %c0_43 = arith.constant 0 : index
    %c0_44 = arith.constant 0 : index
    %48 = vector.load %arg15[%c0_43, %c0_44] : memref<1x128xf32, #tpu.memory_space<vmem>>, vector<1x128xf32>
    %49 = vector.broadcast %48 : vector<1x128xf32> to vector<16x128xf32>
    %50 = arith.addf %47, %49 : vector<16x128xf32>
    %cst_45 = arith.constant 0.000000e+00 : f32
    %51 = vector.broadcast %cst_45 : f32 to vector<16x128xf32>
    %52 = arith.maximumf %50, %51 : vector<16x128xf32>
    %53 = arith.addf %45, %52 : vector<16x128xf32>
    %c0_46 = arith.constant 0 : index
    %c0_47 = arith.constant 0 : index
    %c0_48 = arith.constant 0 : index
    %54 = vector.load %arg16[%c0_46, %c0_47, %c0_48] : memref<1x16x128xf32, #tpu.memory_space<vmem>>, vector<1x16x128xf32>
    %55 = vector.shape_cast %54 : vector<1x16x128xf32> to vector<16x128xf32>
    %56 = vector.shape_cast %53 : vector<16x128xf32> to vector<1x16x128xf32>
    tpu.vector_store %arg16[%c0_46, %c0_47, %c0_48], %56 {strides = array<i32>} : memref<1x16x128xf32, #tpu.memory_space<vmem>>, vector<1x16x128xf32>,
    return
  }
  func.func @transform_0(%arg0: i32) -> (i32, i32, i32) {
    %c0_i32 = arith.constant 0 : i32
    %c0_i32_0 = arith.constant 0 : i32
    %c0_i32_1 = arith.constant 0 : i32
    return %arg0, %c0_i32, %c0_i32_0 : i32, i32, i32
  }
  func.func @transform_1(%arg0: i32) -> (i32, i32, i32) {
    %c0_i32 = arith.constant 0 : i32
    %c0_i32_0 = arith.constant 0 : i32
    %c0_i32_1 = arith.constant 0 : i32
    return %arg0, %c0_i32, %c0_i32_0 : i32, i32, i32
  }
  func.func @transform_2(%arg0: i32) -> (i32, i32) {
    %c0_i32 = arith.constant 0 : i32
    %c0_i32_0 = arith.constant 0 : i32
    %c0_i32_1 = arith.constant 0 : i32
    return %c0_i32, %c0_i32_0 : i32, i32
  }
  func.func @transform_3(%arg0: i32) -> (i32, i32) {
    %c0_i32 = arith.constant 0 : i32
    %c0_i32_0 = arith.constant 0 : i32
    %c0_i32_1 = arith.constant 0 : i32
    return %c0_i32, %c0_i32_0 : i32, i32
  }
  func.func @transform_4(%arg0: i32) -> (i32, i32) {
    %c0_i32 = arith.constant 0 : i32
    %c0_i32_0 = arith.constant 0 : i32
    %c0_i32_1 = arith.constant 0 : i32
    return %c0_i32, %c0_i32_0 : i32, i32
  }
  func.func @transform_5(%arg0: i32) -> (i32, i32) {
    %c0_i32 = arith.constant 0 : i32
    %c0_i32_0 = arith.constant 0 : i32
    %c0_i32_1 = arith.constant 0 : i32
    return %c0_i32, %c0_i32_0 : i32, i32
  }
  func.func @transform_6(%arg0: i32) -> (i32, i32) {
    %c0_i32 = arith.constant 0 : i32
    %c0_i32_0 = arith.constant 0 : i32
    %c0_i32_1 = arith.constant 0 : i32
    return %c0_i32, %c0_i32_0 : i32, i32
  }
  func.func @transform_7(%arg0: i32) -> (i32, i32) {
    %c0_i32 = arith.constant 0 : i32
    %c0_i32_0 = arith.constant 0 : i32
    %c0_i32_1 = arith.constant 0 : i32
    return %c0_i32, %c0_i32_0 : i32, i32
  }
  func.func @transform_8(%arg0: i32) -> (i32, i32) {
    %c0_i32 = arith.constant 0 : i32
    %c0_i32_0 = arith.constant 0 : i32
    %c0_i32_1 = arith.constant 0 : i32
    return %c0_i32, %c0_i32_0 : i32, i32
  }
  func.func @transform_9(%arg0: i32) -> (i32, i32) {
    %c0_i32 = arith.constant 0 : i32
    %c0_i32_0 = arith.constant 0 : i32
    %c0_i32_1 = arith.constant 0 : i32
    return %c0_i32, %c0_i32_0 : i32, i32
  }
  func.func @transform_10(%arg0: i32) -> (i32, i32) {
    %c0_i32 = arith.constant 0 : i32
    %c0_i32_0 = arith.constant 0 : i32
    %c0_i32_1 = arith.constant 0 : i32
    return %c0_i32, %c0_i32_0 : i32, i32
  }
  func.func @transform_11(%arg0: i32) -> (i32, i32) {
    %c0_i32 = arith.constant 0 : i32
    %c0_i32_0 = arith.constant 0 : i32
    %c0_i32_1 = arith.constant 0 : i32
    return %c0_i32, %c0_i32_0 : i32, i32
  }
  func.func @transform_12(%arg0: i32) -> (i32, i32) {
    %c0_i32 = arith.constant 0 : i32
    %c0_i32_0 = arith.constant 0 : i32
    %c0_i32_1 = arith.constant 0 : i32
    return %c0_i32, %c0_i32_0 : i32, i32
  }
  func.func @transform_13(%arg0: i32) -> (i32, i32) {
    %c0_i32 = arith.constant 0 : i32
    %c0_i32_0 = arith.constant 0 : i32
    %c0_i32_1 = arith.constant 0 : i32
    return %c0_i32, %c0_i32_0 : i32, i32
  }
  func.func @transform_14(%arg0: i32) -> (i32, i32) {
    %c0_i32 = arith.constant 0 : i32
    %c0_i32_0 = arith.constant 0 : i32
    %c0_i32_1 = arith.constant 0 : i32
    return %c0_i32, %c0_i32_0 : i32, i32
  }
  func.func @transform_15(%arg0: i32) -> (i32, i32, i32) {
    %c0_i32 = arith.constant 0 : i32
    %c0_i32_0 = arith.constant 0 : i32
    %c0_i32_1 = arith.constant 0 : i32
    return %arg0, %c0_i32, %c0_i32_0 : i32, i32, i32
  }
}

</mosaic_0001>

<llo_original>
// kernel: tpu_custom_call.1
$region0: #{tpu_custom_call.1}
  #allocation0 [shape = 'u32[]', space=smem, size = 0x4, offset = 0x4, fixed_abs, tag = 'smem constant byte address 0x4 - core index']
  #allocation1 [shape = 'u32[144,128]{1,0:T(1,128)}', space=vmem, size = 0x12000, scoped, tag = 'internal scratch']
  %s0 = inlined_call_operand.hbm [shape: f32[2,16,128], index: 0, kind: input, shape index: {}]
  %s1 = inlined_call_operand.hbm [shape: f32[2,16,16], index: 1, kind: input, shape index: {}]
  %s2 = inlined_call_operand.hbm [shape: f32[128,128], index: 2, kind: input, shape index: {}]
  %s3 = inlined_call_operand.hbm [shape: f32[128,128], index: 3, kind: input, shape index: {}]
  %s4 = inlined_call_operand.vmem [shape: f32[1,128], index: 4, kind: input, shape index: {}]
  %s5 = inlined_call_operand.hbm [shape: f32[128,128], index: 5, kind: input, shape index: {}]
  %s6 = inlined_call_operand.vmem [shape: f32[1,128], index: 6, kind: input, shape index: {}]
  %s7 = inlined_call_operand.hbm [shape: f32[128,128], index: 7, kind: input, shape index: {}]
  %s8 = inlined_call_operand.vmem [shape: f32[1,128], index: 8, kind: input, shape index: {}]
  %s9 = inlined_call_operand.hbm [shape: f32[128,128], index: 9, kind: input, shape index: {}]
  %s10 = inlined_call_operand.vmem [shape: f32[1,128], index: 10, kind: input, shape index: {}]
  %s11 = inlined_call_operand.hbm [shape: f32[128,128], index: 11, kind: input, shape index: {}]
  %s12 = inlined_call_operand.vmem [shape: f32[1,128], index: 12, kind: input, shape index: {}]
  %s13 = inlined_call_operand.hbm [shape: f32[128,128], index: 13, kind: input, shape index: {}]
  %s14 = inlined_call_operand.vmem [shape: f32[1,128], index: 14, kind: input, shape index: {}]
  %s15 = inlined_call_operand.hbm [shape: f32[2,16,128], index: 15, kind: output, shape index: {}]
  %s16 = sld [smem:[#allocation0]]
  $region129: #{tpu_custom_call.1} parent=0
    _
  %s18 = ssub.s32 1, %s16
  %s19 = scalar_select 0, %s18, %s16
  $region1: #{tpu_custom_call.1} parent=0
    #allocation2 [shape = 'u8[16384]{0}', space=vmem, size = 0x4000, scoped, tag = 'input window, operand 0']
    #allocation3 [shape = 's32[2]{0}', space=sflag, size = 0x8, scoped, tag = 'scoped memory for tpu_custom_call.1']
    #allocation4 [shape = 's32[2]{0}', space=sflag, size = 0x8, scoped, tag = 'scoped memory for tpu_custom_call.1']
    #allocation5 [shape = 'u8[16384]{0}', space=vmem, size = 0x4000, scoped, tag = 'input window, operand 1']
    #allocation6 [shape = 's32[2]{0}', space=sflag, size = 0x8, scoped, tag = 'scoped memory for tpu_custom_call.1']
    #allocation7 [shape = 'u8[65536]{0}', space=vmem, size = 0x10000, scoped, tag = 'input window, operand 2, single buffered']
    #allocation8 [shape = 'u8[65536]{0}', space=vmem, size = 0x10000, scoped, tag = 'input window, operand 3, single buffered']
    #allocation9 [shape = 's32[1]{0}', space=sflag, size = 0x4, scoped, tag = 'scoped memory for tpu_custom_call.1']
    #allocation10 [shape = 'u8[65536]{0}', space=vmem, size = 0x10000, scoped, tag = 'input window, operand 5, single buffered']
    #allocation11 [shape = 'u8[65536]{0}', space=vmem, size = 0x10000, scoped, tag = 'input window, operand 7, single buffered']
    #allocation12 [shape = 's32[1]{0}', space=sflag, size = 0x4, scoped, tag = 'scoped memory for tpu_custom_call.1']
    #allocation13 [shape = 'u8[65536]{0}', space=vmem, size = 0x10000, scoped, tag = 'input window, operand 9, single buffered']
    #allocation14 [shape = 'u8[65536]{0}', space=vmem, size = 0x10000, scoped, tag = 'input window, operand 11, single buffered']
    #allocation15 [shape = 's32[1]{0}', space=sflag, size = 0x4, scoped, tag = 'scoped memory for tpu_custom_call.1']
    #allocation16 [shape = 'u8[65536]{0}', space=vmem, size = 0x10000, scoped, tag = 'input window, operand 13, single buffered']
    #allocation17 [shape = 'u8[16384]{0}', space=vmem, size = 0x4000, scoped, tag = 'output window, operand 0']
    %20 = vsyncpa [#allocation3], 0
    %s21 = scalar_lea.sflag [#allocation3], 1
    %22 = vsyncpa %s21, 0
    %23 = vsyncpa [#allocation6], 0
    %s24 = scalar_lea.sflag [#allocation6], 1
    %25 = vsyncpa %s24, 0
    %26 = vsyncpa [#allocation9], 0
    %27 = vsyncpa [#allocation12], 0
    %28 = vsyncpa [#allocation15], 0
    %29 = vsyncpa [#allocation4], 0
    %s30 = scalar_lea.sflag [#allocation4], 1
    %31 = vsyncpa %s30, 0
    loop: start=0, step=1, limit=4
    $region2: #{tpu_custom_call.1} parent=1 // loop_pre_header
      _
    $region3: #{tpu_custom_call.1} parent=1 // loop_header
      %s33 = sphi 0, %s37
      %p34 = scmp.ge.s32.totalorder %s33, 4
      %s43 = sphi 0, %s45
      %s46 = sphi 0, %s43
      %s47 = sphi 0, %s46
      %s63 = sphi 0, %s47
      %s69 = sphi 0, %s71
      %s72 = sphi 0, %s69
      %s73 = sphi 0, %s72
      %s89 = sphi 0, %s73
      %s93 = sphi 0, %s93
      %s95 = sphi 0, %s93
      %s96 = sphi 0, %s95
      %s110 = sphi 0, %s96
      %s114 = sphi 0, %s114
      %s116 = sphi 0, %s114
      %s117 = sphi 0, %s116
      %s131 = sphi 0, %s117
      %s135 = sphi 0, %s135
      %s137 = sphi 0, %s135
      %s138 = sphi 0, %s137
      %s152 = sphi 0, %s138
      %s156 = sphi 0, %s156
      %s158 = sphi 0, %s156
      %s159 = sphi 0, %s158
      %s173 = sphi 0, %s159
      %s177 = sphi 0, %s177
      %s179 = sphi 0, %s177
      %s180 = sphi 0, %s179
      %s194 = sphi 0, %s180
      %s198 = sphi 0, %s198
      %s200 = sphi 0, %s198
      %s201 = sphi 0, %s200
      %s215 = sphi 0, %s201
      %s219 = sphi 0, %s219
      %s221 = sphi 0, %s219
      %s222 = sphi 0, %s221
      %s236 = sphi 0, %s222
      %s240 = sphi 0, %s240
      %s242 = sphi 0, %s240
      %s243 = sphi 0, %s242
      %s257 = sphi 0, %s243
      %s261 = sphi 0, %s261
      %s263 = sphi 0, %s261
      %s264 = sphi 0, %s263
      %s278 = sphi 0, %s264
      %s282 = sphi 0, %s282
      %s284 = sphi 0, %s282
      %s285 = sphi 0, %s284
      %s299 = sphi 0, %s285
      %s303 = sphi 0, %s303
      %s305 = sphi 0, %s303
      %s306 = sphi 0, %s305
      %s320 = sphi 0, %s306
      %s324 = sphi 0, %s324
      %s326 = sphi 0, %s324
      %s327 = sphi 0, %s326
      %s341 = sphi 0, %s327
      %s345 = sphi 0, %s345
      %s347 = sphi 0, %s345
      %s348 = sphi 0, %s347
      %s362 = sphi 0, %s348
      %s368 = sphi 0, %s370
      %s371 = sphi 0, %s368
      %s372 = sphi 0, %s371
      %s388 = sphi 0, %s372
    $region4: #{tpu_custom_call.1} parent=1 // loop_header_branch
      %36 = sbr.rel (%p34) target = $region8
    $region5: #{tpu_custom_call.1} parent=1 // loop_body
      %s38 = ssub.s32 %s33, 1
      %s39 = ssub.s32 %s33, 2
      %s40 = sadd.s32 %s33, 1
      %s41 = ssub.s32 %s33, %s40
      %p42 = scmp.eq.s32.totalorder %s41, 0
      %s44 = sadd.s32 %s43, 1
      %s45 = scalar_select %p42, %s43, %s44
      %p48 = pneg %p42
      %p49 = scmp.eq.s32.totalorder %s33, 1
      %p50 = por %p48, %p49
      %p51 = scmp.ne.s32.totalorder %s43, %s46
      %p52 = scmp.eq.s32.totalorder %s33, 0
      %p53 = por %p51, %p52
      %p54 = scmp.ne.s32.totalorder %s43, %s46
      %p55 = scmp.eq.s32.totalorder %s38, 1
      %p56 = por %p54, %p55
      %p57 = scmp.ne.s32.totalorder %s46, %s47
      %p58 = scmp.eq.s32.totalorder %s38, 0
      %p59 = por %p57, %p58
      %p60 = scmp.ne.s32.totalorder %s46, %s47
      %p61 = scmp.eq.s32.totalorder %s39, 1
      %p62 = por %p60, %p61
      %p64 = scmp.ne.s32.totalorder %s47, %s63
      %p65 = scmp.eq.s32.totalorder %s39, 0
      %p66 = por %p64, %p65
      %s67 = ssub.s32 %s33, %s40
      %p68 = scmp.eq.s32.totalorder %s67, 0
      %s70 = sadd.s32 %s69, 1
      %s71 = scalar_select %p68, %s69, %s70
      %p74 = pneg %p68
      %p75 = scmp.eq.s32.totalorder %s33, 1
      %p76 = por %p74, %p75
      %p77 = scmp.ne.s32.totalorder %s69, %s72
      %p78 = scmp.eq.s32.totalorder %s33, 0
      %p79 = por %p77, %p78
      %p80 = scmp.ne.s32.totalorder %s69, %s72
      %p81 = scmp.eq.s32.totalorder %s38, 1
      %p82 = por %p80, %p81
      %p83 = scmp.ne.s32.totalorder %s72, %s73
      %p84 = scmp.eq.s32.totalorder %s38, 0
      %p85 = por %p83, %p84
      %p86 = scmp.ne.s32.totalorder %s72, %s73
      %p87 = scmp.eq.s32.totalorder %s39, 1
      %p88 = por %p86, %p87
      %p90 = scmp.ne.s32.totalorder %s73, %s89
      %p91 = scmp.eq.s32.totalorder %s39, 0
      %p92 = por %p90, %p91
      %s94 = sadd.s32 %s93, 1
      %p97 = scmp.eq.s32.totalorder %s33, 1
      %p98 = scmp.ne.s32.totalorder %s93, %s95
      %p99 = scmp.eq.s32.totalorder %s33, 0
      %p100 = por %p98, %p99
      %p101 = scmp.ne.s32.totalorder %s93, %s95
      %p102 = scmp.eq.s32.totalorder %s38, 1
      %p103 = por %p101, %p102
      %p104 = scmp.ne.s32.totalorder %s95, %s96
      %p105 = scmp.eq.s32.totalorder %s38, 0
      %p106 = por %p104, %p105
      %p107 = scmp.ne.s32.totalorder %s95, %s96
      %p108 = scmp.eq.s32.totalorder %s39, 1
      %p109 = por %p107, %p108
      %p111 = scmp.ne.s32.totalorder %s96, %s110
      %p112 = scmp.eq.s32.totalorder %s39, 0
      %p113 = por %p111, %p112
      %s115 = sadd.s32 %s114, 1
      %p118 = scmp.eq.s32.totalorder %s33, 1
      %p119 = scmp.ne.s32.totalorder %s114, %s116
      %p120 = scmp.eq.s32.totalorder %s33, 0
      %p121 = por %p119, %p120
      %p122 = scmp.ne.s32.totalorder %s114, %s116
      %p123 = scmp.eq.s32.totalorder %s38, 1
      %p124 = por %p122, %p123
      %p125 = scmp.ne.s32.totalorder %s116, %s117
      %p126 = scmp.eq.s32.totalorder %s38, 0
      %p127 = por %p125, %p126
      %p128 = scmp.ne.s32.totalorder %s116, %s117
      %p129 = scmp.eq.s32.totalorder %s39, 1
      %p130 = por %p128, %p129
      %p132 = scmp.ne.s32.totalorder %s117, %s131
      %p133 = scmp.eq.s32.totalorder %s39, 0
      %p134 = por %p132, %p133
      %s136 = sadd.s32 %s135, 1
      %p139 = scmp.eq.s32.totalorder %s33, 1
      %p140 = scmp.ne.s32.totalorder %s135, %s137
      %p141 = scmp.eq.s32.totalorder %s33, 0
      %p142 = por %p140, %p141
      %p143 = scmp.ne.s32.totalorder %s135, %s137
      %p144 = scmp.eq.s32.totalorder %s38, 1
      %p145 = por %p143, %p144
      %p146 = scmp.ne.s32.totalorder %s137, %s138
      %p147 = scmp.eq.s32.totalorder %s38, 0
      %p148 = por %p146, %p147
      %p149 = scmp.ne.s32.totalorder %s137, %s138
      %p150 = scmp.eq.s32.totalorder %s39, 1
      %p151 = por %p149, %p150
      %p153 = scmp.ne.s32.totalorder %s138, %s152
      %p154 = scmp.eq.s32.totalorder %s39, 0
      %p155 = por %p153, %p154
      %s157 = sadd.s32 %s156, 1
      %p160 = scmp.eq.s32.totalorder %s33, 1
      %p161 = scmp.ne.s32.totalorder %s156, %s158
      %p162 = scmp.eq.s32.totalorder %s33, 0
      %p163 = por %p161, %p162
      %p164 = scmp.ne.s32.totalorder %s156, %s158
      %p165 = scmp.eq.s32.totalorder %s38, 1
      %p166 = por %p164, %p165
      %p167 = scmp.ne.s32.totalorder %s158, %s159
      %p168 = scmp.eq.s32.totalorder %s38, 0
      %p169 = por %p167, %p168
      %p170 = scmp.ne.s32.totalorder %s158, %s159
      %p171 = scmp.eq.s32.totalorder %s39, 1
      %p172 = por %p170, %p171
      %p174 = scmp.ne.s32.totalorder %s159, %s173
      %p175 = scmp.eq.s32.totalorder %s39, 0
      %p176 = por %p174, %p175
      %s178 = sadd.s32 %s177, 1
      %p181 = scmp.eq.s32.totalorder %s33, 1
      %p182 = scmp.ne.s32.totalorder %s177, %s179
      %p183 = scmp.eq.s32.totalorder %s33, 0
      %p184 = por %p182, %p183
      %p185 = scmp.ne.s32.totalorder %s177, %s179
      %p186 = scmp.eq.s32.totalorder %s38, 1
      %p187 = por %p185, %p186
      %p188 = scmp.ne.s32.totalorder %s179, %s180
      %p189 = scmp.eq.s32.totalorder %s38, 0
      %p190 = por %p188, %p189
      %p191 = scmp.ne.s32.totalorder %s179, %s180
      %p192 = scmp.eq.s32.totalorder %s39, 1
      %p193 = por %p191, %p192
      %p195 = scmp.ne.s32.totalorder %s180, %s194
      %p196 = scmp.eq.s32.totalorder %s39, 0
      %p197 = por %p195, %p196
      %s199 = sadd.s32 %s198, 1
      %p202 = scmp.eq.s32.totalorder %s33, 1
      %p203 = scmp.ne.s32.totalorder %s198, %s200
      %p204 = scmp.eq.s32.totalorder %s33, 0
      %p205 = por %p203, %p204
      %p206 = scmp.ne.s32.totalorder %s198, %s200
      %p207 = scmp.eq.s32.totalorder %s38, 1
      %p208 = por %p206, %p207
      %p209 = scmp.ne.s32.totalorder %s200, %s201
      %p210 = scmp.eq.s32.totalorder %s38, 0
      %p211 = por %p209, %p210
      %p212 = scmp.ne.s32.totalorder %s200, %s201
      %p213 = scmp.eq.s32.totalorder %s39, 1
      %p214 = por %p212, %p213
      %p216 = scmp.ne.s32.totalorder %s201, %s215
      %p217 = scmp.eq.s32.totalorder %s39, 0
      %p218 = por %p216, %p217
      %s220 = sadd.s32 %s219, 1
      %p223 = scmp.eq.s32.totalorder %s33, 1
      %p224 = scmp.ne.s32.totalorder %s219, %s221
      %p225 = scmp.eq.s32.totalorder %s33, 0
      %p226 = por %p224, %p225
      %p227 = scmp.ne.s32.totalorder %s219, %s221
      %p228 = scmp.eq.s32.totalorder %s38, 1
      %p229 = por %p227, %p228
      %p230 = scmp.ne.s32.totalorder %s221, %s222
      %p231 = scmp.eq.s32.totalorder %s38, 0
      %p232 = por %p230, %p231
      %p233 = scmp.ne.s32.totalorder %s221, %s222
      %p234 = scmp.eq.s32.totalorder %s39, 1
      %p235 = por %p233, %p234
      %p237 = scmp.ne.s32.totalorder %s222, %s236
      %p238 = scmp.eq.s32.totalorder %s39, 0
      %p239 = por %p237, %p238
      %s241 = sadd.s32 %s240, 1
      %p244 = scmp.eq.s32.totalorder %s33, 1
      %p245 = scmp.ne.s32.totalorder %s240, %s242
      %p246 = scmp.eq.s32.totalorder %s33, 0
      %p247 = por %p245, %p246
      %p248 = scmp.ne.s32.totalorder %s240, %s242
      %p249 = scmp.eq.s32.totalorder %s38, 1
      %p250 = por %p248, %p249
      %p251 = scmp.ne.s32.totalorder %s242, %s243
      %p252 = scmp.eq.s32.totalorder %s38, 0
      %p253 = por %p251, %p252
      %p254 = scmp.ne.s32.totalorder %s242, %s243
      %p255 = scmp.eq.s32.totalorder %s39, 1
      %p256 = por %p254, %p255
      %p258 = scmp.ne.s32.totalorder %s243, %s257
      %p259 = scmp.eq.s32.totalorder %s39, 0
      %p260 = por %p258, %p259
      %s262 = sadd.s32 %s261, 1
      %p265 = scmp.eq.s32.totalorder %s33, 1
      %p266 = scmp.ne.s32.totalorder %s261, %s263
      %p267 = scmp.eq.s32.totalorder %s33, 0
      %p268 = por %p266, %p267
      %p269 = scmp.ne.s32.totalorder %s261, %s263
      %p270 = scmp.eq.s32.totalorder %s38, 1
      %p271 = por %p269, %p270
      %p272 = scmp.ne.s32.totalorder %s263, %s264
      %p273 = scmp.eq.s32.totalorder %s38, 0
      %p274 = por %p272, %p273
      %p275 = scmp.ne.s32.totalorder %s263, %s264
      %p276 = scmp.eq.s32.totalorder %s39, 1
      %p277 = por %p275, %p276
      %p279 = scmp.ne.s32.totalorder %s264, %s278
      %p280 = scmp.eq.s32.totalorder %s39, 0
      %p281 = por %p279, %p280
      %s283 = sadd.s32 %s282, 1
      %p286 = scmp.eq.s32.totalorder %s33, 1
      %p287 = scmp.ne.s32.totalorder %s282, %s284
      %p288 = scmp.eq.s32.totalorder %s33, 0
      %p289 = por %p287, %p288
      %p290 = scmp.ne.s32.totalorder %s282, %s284
      %p291 = scmp.eq.s32.totalorder %s38, 1
      %p292 = por %p290, %p291
      %p293 = scmp.ne.s32.totalorder %s284, %s285
      %p294 = scmp.eq.s32.totalorder %s38, 0
      %p295 = por %p293, %p294
      %p296 = scmp.ne.s32.totalorder %s284, %s285
      %p297 = scmp.eq.s32.totalorder %s39, 1
      %p298 = por %p296, %p297
      %p300 = scmp.ne.s32.totalorder %s285, %s299
      %p301 = scmp.eq.s32.totalorder %s39, 0
      %p302 = por %p300, %p301
      %s304 = sadd.s32 %s303, 1
      %p307 = scmp.eq.s32.totalorder %s33, 1
      %p308 = scmp.ne.s32.totalorder %s303, %s305
      %p309 = scmp.eq.s32.totalorder %s33, 0
      %p310 = por %p308, %p309
      %p311 = scmp.ne.s32.totalorder %s303, %s305
      %p312 = scmp.eq.s32.totalorder %s38, 1
      %p313 = por %p311, %p312
      %p314 = scmp.ne.s32.totalorder %s305, %s306
      %p315 = scmp.eq.s32.totalorder %s38, 0
      %p316 = por %p314, %p315
      %p317 = scmp.ne.s32.totalorder %s305, %s306
      %p318 = scmp.eq.s32.totalorder %s39, 1
      %p319 = por %p317, %p318
      %p321 = scmp.ne.s32.totalorder %s306, %s320
      %p322 = scmp.eq.s32.totalorder %s39, 0
      %p323 = por %p321, %p322
      %s325 = sadd.s32 %s324, 1
      %p328 = scmp.eq.s32.totalorder %s33, 1
      %p329 = scmp.ne.s32.totalorder %s324, %s326
      %p330 = scmp.eq.s32.totalorder %s33, 0
      %p331 = por %p329, %p330
      %p332 = scmp.ne.s32.totalorder %s324, %s326
      %p333 = scmp.eq.s32.totalorder %s38, 1
      %p334 = por %p332, %p333
      %p335 = scmp.ne.s32.totalorder %s326, %s327
      %p336 = scmp.eq.s32.totalorder %s38, 0
      %p337 = por %p335, %p336
      %p338 = scmp.ne.s32.totalorder %s326, %s327
      %p339 = scmp.eq.s32.totalorder %s39, 1
      %p340 = por %p338, %p339
      %p342 = scmp.ne.s32.totalorder %s327, %s341
      %p343 = scmp.eq.s32.totalorder %s39, 0
      %p344 = por %p342, %p343
      %s346 = sadd.s32 %s345, 1
      %p349 = scmp.eq.s32.totalorder %s33, 1
      %p350 = scmp.ne.s32.totalorder %s345, %s347
      %p351 = scmp.eq.s32.totalorder %s33, 0
      %p352 = por %p350, %p351
      %p353 = scmp.ne.s32.totalorder %s345, %s347
      %p354 = scmp.eq.s32.totalorder %s38, 1
      %p355 = por %p353, %p354
      %p356 = scmp.ne.s32.totalorder %s347, %s348
      %p357 = scmp.eq.s32.totalorder %s38, 0
      %p358 = por %p356, %p357
      %p359 = scmp.ne.s32.totalorder %s347, %s348
      %p360 = scmp.eq.s32.totalorder %s39, 1
      %p361 = por %p359, %p360
      %p363 = scmp.ne.s32.totalorder %s348, %s362
      %p364 = scmp.eq.s32.totalorder %s39, 0
      %p365 = por %p363, %p364
      %s366 = ssub.s32 %s33, %s40
      %p367 = scmp.eq.s32.totalorder %s366, 0
      %s369 = sadd.s32 %s368, 1
      %s370 = scalar_select %p367, %s368, %s369
      %p373 = pneg %p367
      %p374 = scmp.eq.s32.totalorder %s33, 1
      %p375 = por %p373, %p374
      %p376 = scmp.ne.s32.totalorder %s368, %s371
      %p377 = scmp.eq.s32.totalorder %s33, 0
      %p378 = por %p376, %p377
      %p379 = scmp.ne.s32.totalorder %s368, %s371
      %p380 = scmp.eq.s32.totalorder %s38, 1
      %p381 = por %p379, %p380
      %p382 = scmp.ne.s32.totalorder %s371, %s372
      %p383 = scmp.eq.s32.totalorder %s38, 0
      %p384 = por %p382, %p383
      %p385 = scmp.ne.s32.totalorder %s371, %s372
      %p386 = scmp.eq.s32.totalorder %s39, 1
      %p387 = por %p385, %p386
      %p389 = scmp.ne.s32.totalorder %s372, %s388
      %p390 = scmp.eq.s32.totalorder %s39, 0
      %p391 = por %p389, %p390
      %p392 = scmp.le.s32.totalorder 1, %s33
      %p393 = scmp.lt.s32.totalorder %s33, 3
      %p394 = pnand %p392, %p393
      %p395 = pneg %p394
      // Predicated region
      $region9: #{tpu_custom_call.1} parent=5 // pred_check
        _
      $region10: #{tpu_custom_call.1} parent=5 // pred_check_branch
        %397 = sbr.rel (%p394) target = $region12
      $region11: #{tpu_custom_call.1} parent=5 // pred_region
        %s398 = ssub.s32 %s33, 1
        // Predicated region
        $region13: #{tpu_custom_call.1} parent=11 // pred_check
          %p399 = pneg %p106
        $region14: #{tpu_custom_call.1} parent=11 // pred_check_branch
          %401 = sbr.rel (%p399) target = $region16
        $region15: #{tpu_custom_call.1} parent=11 // pred_region
          %s403 = ssub.s32 2048, 2048
          %404 = vsyncadd [#allocation6], %s403
          %s405 = sshll.u32 [#allocation7], 4
          %s406 = int_to_ptr.vmem [resolvable:$true] %s405
          %411 = dma.hbm_to_vmem [thread:$0]  %s2, 2048, %s406, [#allocation6], 128, 128, 8
        $region16: #{tpu_custom_call.1} parent=11 // pred_fallthru
          _
        // Predicated region
        $region17: #{tpu_custom_call.1} parent=11 // pred_check
          %p412 = pneg %p127
        $region18: #{tpu_custom_call.1} parent=11 // pred_check_branch
          %414 = sbr.rel (%p412) target = $region20
        $region19: #{tpu_custom_call.1} parent=11 // pred_region
          %s416 = ssub.s32 2048, 2048
          %417 = vsyncadd [#allocation9], %s416
          %s418 = sshll.u32 [#allocation8], 4
          %s419 = int_to_ptr.vmem [resolvable:$true] %s418
          %424 = dma.hbm_to_vmem [thread:$0]  %s3, 2048, %s419, [#allocation9], 128, 128, 8
        $region20: #{tpu_custom_call.1} parent=11 // pred_fallthru
          _
        // Predicated region
        $region21: #{tpu_custom_call.1} parent=11 // pred_check
          %p425 = pneg %p148
        $region22: #{tpu_custom_call.1} parent=11 // pred_check_branch
          %427 = sbr.rel (%p425) target = $region24
        $region23: #{tpu_custom_call.1} parent=11 // pred_region
          _
        $region24: #{tpu_custom_call.1} parent=11 // pred_fallthru
          _
        // Predicated region
        $region25: #{tpu_custom_call.1} parent=11 // pred_check
          %p428 = pneg %p169
        $region26: #{tpu_custom_call.1} parent=11 // pred_check_branch
          %430 = sbr.rel (%p428) target = $region28
        $region27: #{tpu_custom_call.1} parent=11 // pred_region
          %s432 = ssub.s32 2048, 2048
          %433 = vsyncadd [#allocation9], %s432
          %s434 = sshll.u32 [#allocation10], 4
          %s435 = int_to_ptr.vmem [resolvable:$true] %s434
          %440 = dma.hbm_to_vmem [thread:$0]  %s5, 2048, %s435, [#allocation9], 128, 128, 8
        $region28: #{tpu_custom_call.1} parent=11 // pred_fallthru
          _
        // Predicated region
        $region29: #{tpu_custom_call.1} parent=11 // pred_check
          %p441 = pneg %p190
        $region30: #{tpu_custom_call.1} parent=11 // pred_check_branch
          %443 = sbr.rel (%p441) target = $region32
        $region31: #{tpu_custom_call.1} parent=11 // pred_region
          _
        $region32: #{tpu_custom_call.1} parent=11 // pred_fallthru
          _
        // Predicated region
        $region33: #{tpu_custom_call.1} parent=11 // pred_check
          %p444 = pneg %p211
        $region34: #{tpu_custom_call.1} parent=11 // pred_check_branch
          %446 = sbr.rel (%p444) target = $region36
        $region35: #{tpu_custom_call.1} parent=11 // pred_region
          %s448 = ssub.s32 2048, 2048
          %449 = vsyncadd [#allocation12], %s448
          %s450 = sshll.u32 [#allocation11], 4
          %s451 = int_to_ptr.vmem [resolvable:$true] %s450
          %456 = dma.hbm_to_vmem [thread:$0]  %s7, 2048, %s451, [#allocation12], 128, 128, 8
        $region36: #{tpu_custom_call.1} parent=11 // pred_fallthru
          _
        // Predicated region
        $region37: #{tpu_custom_call.1} parent=11 // pred_check
          %p457 = pneg %p232
        $region38: #{tpu_custom_call.1} parent=11 // pred_check_branch
          %459 = sbr.rel (%p457) target = $region40
        $region39: #{tpu_custom_call.1} parent=11 // pred_region
          _
        $region40: #{tpu_custom_call.1} parent=11 // pred_fallthru
          _
        // Predicated region
        $region41: #{tpu_custom_call.1} parent=11 // pred_check
          %p460 = pneg %p253
        $region42: #{tpu_custom_call.1} parent=11 // pred_check_branch
          %462 = sbr.rel (%p460) target = $region44
        $region43: #{tpu_custom_call.1} parent=11 // pred_region
          %s464 = ssub.s32 2048, 2048
          %465 = vsyncadd [#allocation12], %s464
          %s466 = sshll.u32 [#allocation13], 4
          %s467 = int_to_ptr.vmem [resolvable:$true] %s466
          %472 = dma.hbm_to_vmem [thread:$0]  %s9, 2048, %s467, [#allocation12], 128, 128, 8
        $region44: #{tpu_custom_call.1} parent=11 // pred_fallthru
          _
        // Predicated region
        $region45: #{tpu_custom_call.1} parent=11 // pred_check
          %p473 = pneg %p274
        $region46: #{tpu_custom_call.1} parent=11 // pred_check_branch
          %475 = sbr.rel (%p473) target = $region48
        $region47: #{tpu_custom_call.1} parent=11 // pred_region
          _
        $region48: #{tpu_custom_call.1} parent=11 // pred_fallthru
          _
        // Predicated region
        $region49: #{tpu_custom_call.1} parent=11 // pred_check
          %p476 = pneg %p295
        $region50: #{tpu_custom_call.1} parent=11 // pred_check_branch
          %478 = sbr.rel (%p476) target = $region52
        $region51: #{tpu_custom_call.1} parent=11 // pred_region
          %s480 = ssub.s32 2048, 2048
          %481 = vsyncadd [#allocation15], %s480
          %s482 = sshll.u32 [#allocation14], 4
          %s483 = int_to_ptr.vmem [resolvable:$true] %s482
          %488 = dma.hbm_to_vmem [thread:$0]  %s11, 2048, %s483, [#allocation15], 128, 128, 8
        $region52: #{tpu_custom_call.1} parent=11 // pred_fallthru
          _
        // Predicated region
        $region53: #{tpu_custom_call.1} parent=11 // pred_check
          %p489 = pneg %p316
        $region54: #{tpu_custom_call.1} parent=11 // pred_check_branch
          %491 = sbr.rel (%p489) target = $region56
        $region55: #{tpu_custom_call.1} parent=11 // pred_region
          _
        $region56: #{tpu_custom_call.1} parent=11 // pred_fallthru
          _
        // Predicated region
        $region57: #{tpu_custom_call.1} parent=11 // pred_check
          %p492 = pneg %p337
        $region58: #{tpu_custom_call.1} parent=11 // pred_check_branch
          %494 = sbr.rel (%p492) target = $region60
        $region59: #{tpu_custom_call.1} parent=11 // pred_region
          %s496 = ssub.s32 2048, 2048
          %497 = vsyncadd [#allocation15], %s496
          %s498 = sshll.u32 [#allocation16], 4
          %s499 = int_to_ptr.vmem [resolvable:$true] %s498
          %504 = dma.hbm_to_vmem [thread:$0]  %s13, 2048, %s499, [#allocation15], 128, 128, 8
        $region60: #{tpu_custom_call.1} parent=11 // pred_fallthru
          _
        // Predicated region
        $region61: #{tpu_custom_call.1} parent=11 // pred_check
          %p505 = pneg %p358
        $region62: #{tpu_custom_call.1} parent=11 // pred_check_branch
          %507 = sbr.rel (%p505) target = $region64
        $region63: #{tpu_custom_call.1} parent=11 // pred_region
          _
        $region64: #{tpu_custom_call.1} parent=11 // pred_fallthru
          _
      $region12: #{tpu_custom_call.1} parent=5 // pred_fallthru
        _
      %p508 = scmp.lt.s32.totalorder %s33, 2
      // Predicated region
      $region65: #{tpu_custom_call.1} parent=5 // pred_check
        %p509 = pneg %p508
      $region66: #{tpu_custom_call.1} parent=5 // pred_check_branch
        %511 = sbr.rel (%p509) target = $region68
      $region67: #{tpu_custom_call.1} parent=5 // pred_region
        // Predicated region
        $region69: #{tpu_custom_call.1} parent=67 // pred_check
          %p512 = pneg %p53
        $region70: #{tpu_custom_call.1} parent=67 // pred_check_branch
          %514 = sbr.rel (%p512) target = $region72
        $region71: #{tpu_custom_call.1} parent=67 // pred_region
          %s515 = sand.u32 %s43, 1
          %s516 = scalar_lea.sflag [#allocation3], %s515
          %s517 = sand.u32 %s43, 1
          %s518 = smul.addr %s517, 16
          %s519 = scalar_lea.vmem [#allocation2], %s518
          %s521 = ssub.s32 256, 256
          %522 = vsyncadd %s516, %s521
          %s523 = smul.addr %s33, 2
          %s524 = smul.addr %s523, 128
          %s525 = scalar_lea.hbm %s0, %s524
          %s526 = sshll.u32 %s519, 4
          %s527 = int_to_ptr.vmem [resolvable:$true] %s526
          %532 = dma.hbm_to_vmem [thread:$0]  %s525, 256, %s527, %s516, 128, 128, 8
        $region72: #{tpu_custom_call.1} parent=67 // pred_fallthru
          _
        // Predicated region
        $region73: #{tpu_custom_call.1} parent=67 // pred_check
          %p533 = pneg %p79
        $region74: #{tpu_custom_call.1} parent=67 // pred_check_branch
          %535 = sbr.rel (%p533) target = $region76
        $region75: #{tpu_custom_call.1} parent=67 // pred_region
          %s536 = sand.u32 %s33, 1
          %s537 = scalar_lea.sflag [#allocation6], %s536
          %s538 = sand.u32 %s69, 1
          %s539 = smul.addr %s538, 16
          %s540 = scalar_lea.vmem [#allocation5], %s539
          %s542 = ssub.s32 256, 256
          %543 = vsyncadd %s537, %s542
          %s544 = smul.addr %s33, 2
          %s545 = smul.addr %s544, 128
          %s546 = scalar_lea.hbm %s1, %s545
          %s547 = sshll.u32 %s540, 4
          %s548 = int_to_ptr.vmem [resolvable:$true] %s547
          %553 = dma.hbm_to_vmem [thread:$0]  %s546, 256, %s548, %s537, 128, 128, 8
        $region76: #{tpu_custom_call.1} parent=67 // pred_fallthru
          _
      $region68: #{tpu_custom_call.1} parent=5 // pred_fallthru
        _
      %p554 = scmp.le.s32.totalorder 1, %s33
      %p555 = scmp.lt.s32.totalorder %s33, 3
      %p556 = pnand %p554, %p555
      %p557 = pneg %p556
      // Predicated region
      $region77: #{tpu_custom_call.1} parent=5 // pred_check
        _
      $region78: #{tpu_custom_call.1} parent=5 // pred_check_branch
        %559 = sbr.rel (%p556) target = $region80
      $region79: #{tpu_custom_call.1} parent=5 // pred_region
        %s560 = ssub.s32 %s33, 1
        %s561 = sand.u32 %s46, 1
        %s562 = scalar_lea.sflag [#allocation3], %s561
        %s563 = sand.u32 %s46, 1
        %s564 = smul.addr %s563, 16
        %s565 = scalar_lea.vmem [#allocation2], %s564
        // Predicated region
        $region81: #{tpu_custom_call.1} parent=79 // pred_check
          %p566 = pneg %p59
        $region82: #{tpu_custom_call.1} parent=79 // pred_check_branch
          %568 = sbr.rel (%p566) target = $region84
        $region83: #{tpu_custom_call.1} parent=79 // pred_region
          %569 = dma.done %s562, 256
        $region84: #{tpu_custom_call.1} parent=79 // pred_fallthru
          _
        %s570 = sand.u32 %s38, 1
        %s571 = scalar_lea.sflag [#allocation6], %s570
        %s572 = sand.u32 %s72, 1
        %s573 = smul.addr %s572, 16
        %s574 = scalar_lea.vmem [#allocation5], %s573
        // Predicated region
        $region85: #{tpu_custom_call.1} parent=79 // pred_check
          %p575 = pneg %p85
        $region86: #{tpu_custom_call.1} parent=79 // pred_check_branch
          %577 = sbr.rel (%p575) target = $region88
        $region87: #{tpu_custom_call.1} parent=79 // pred_region
          %578 = dma.done %s571, 256
        $region88: #{tpu_custom_call.1} parent=79 // pred_fallthru
          _
        // Predicated region
        $region89: #{tpu_custom_call.1} parent=79 // pred_check
          %p579 = pneg %p106
        $region90: #{tpu_custom_call.1} parent=79 // pred_check_branch
          %581 = sbr.rel (%p579) target = $region92
        $region91: #{tpu_custom_call.1} parent=79 // pred_region
          %582 = dma.done [#allocation6], 2048
        $region92: #{tpu_custom_call.1} parent=79 // pred_fallthru
          _
        // Predicated region
        $region93: #{tpu_custom_call.1} parent=79 // pred_check
          %p583 = pneg %p127
        $region94: #{tpu_custom_call.1} parent=79 // pred_check_branch
          %585 = sbr.rel (%p583) target = $region96
        $region95: #{tpu_custom_call.1} parent=79 // pred_region
          %586 = dma.done [#allocation9], 2048
        $region96: #{tpu_custom_call.1} parent=79 // pred_fallthru
          _
        // Predicated region
        $region97: #{tpu_custom_call.1} parent=79 // pred_check
          %p587 = pneg %p169
        $region98: #{tpu_custom_call.1} parent=79 // pred_check_branch
          %589 = sbr.rel (%p587) target = $region100
        $region99: #{tpu_custom_call.1} parent=79 // pred_region
          %590 = dma.done [#allocation9], 2048
        $region100: #{tpu_custom_call.1} parent=79 // pred_fallthru
          _
        // Predicated region
        $region101: #{tpu_custom_call.1} parent=79 // pred_check
          %p591 = pneg %p211
        $region102: #{tpu_custom_call.1} parent=79 // pred_check_branch
          %593 = sbr.rel (%p591) target = $region104
        $region103: #{tpu_custom_call.1} parent=79 // pred_region
          %594 = dma.done [#allocation12], 2048
        $region104: #{tpu_custom_call.1} parent=79 // pred_fallthru
          _
        // Predicated region
        $region105: #{tpu_custom_call.1} parent=79 // pred_check
          %p595 = pneg %p253
        $region106: #{tpu_custom_call.1} parent=79 // pred_check_branch
          %597 = sbr.rel (%p595) target = $region108
        $region107: #{tpu_custom_call.1} parent=79 // pred_region
          %598 = dma.done [#allocation12], 2048
        $region108: #{tpu_custom_call.1} parent=79 // pred_fallthru
          _
        // Predicated region
        $region109: #{tpu_custom_call.1} parent=79 // pred_check
          %p599 = pneg %p295
        $region110: #{tpu_custom_call.1} parent=79 // pred_check_branch
          %601 = sbr.rel (%p599) target = $region112
        $region111: #{tpu_custom_call.1} parent=79 // pred_region
          %602 = dma.done [#allocation15], 2048
        $region112: #{tpu_custom_call.1} parent=79 // pred_fallthru
          _
        // Predicated region
        $region113: #{tpu_custom_call.1} parent=79 // pred_check
          %p603 = pneg %p337
        $region114: #{tpu_custom_call.1} parent=79 // pred_check_branch
          %605 = sbr.rel (%p603) target = $region116
        $region115: #{tpu_custom_call.1} parent=79 // pred_region
          %606 = dma.done [#allocation15], 2048
        $region116: #{tpu_custom_call.1} parent=79 // pred_fallthru
          _
        %s607 = sand.u32 %s46, 1
        %s608 = scalar_lea.sflag [#allocation3], %s607
        %s609 = sand.u32 %s46, 1
        %s610 = smul.addr %s609, 16
        %s611 = scalar_lea.vmem [#allocation2], %s610
        %p612 = pneg %p59
        %p613 = pneg %p56
        %s614 = sand.u32 %s38, 1
        %s615 = scalar_lea.sflag [#allocation6], %s614
        %s616 = sand.u32 %s72, 1
        %s617 = smul.addr %s616, 16
        %s618 = scalar_lea.vmem [#allocation5], %s617
        %p619 = pneg %p85
        %p620 = pneg %p82
        %p621 = pneg %p106
        %p622 = pneg %p103
        %p623 = pneg %p127
        %p624 = pneg %p124
        %p625 = pneg %p148
        %p626 = pneg %p145
        %p627 = pneg %p169
        %p628 = pneg %p166
        %p629 = pneg %p190
        %p630 = pneg %p187
        %p631 = pneg %p211
        %p632 = pneg %p208
        %p633 = pneg %p232
        %p634 = pneg %p229
        %p635 = pneg %p253
        %p636 = pneg %p250
        %p637 = pneg %p274
        %p638 = pneg %p271
        %p639 = pneg %p295
        %p640 = pneg %p292
        %p641 = pneg %p316
        %p642 = pneg %p313
        %p643 = pneg %p337
        %p644 = pneg %p334
        %p645 = pneg %p358
        %p646 = pneg %p355
        %p647 = pneg %p384
        %p648 = pneg %p381
        %s649 = sand.u32 %s371, 1
        %s650 = scalar_lea.sflag [#allocation4], %s649
        %s651 = sand.u32 %s371, 1
        %s652 = smul.addr %s651, 16
        %s653 = scalar_lea.vmem [#allocation17], %s652
        %v654 = vld [vmem:[%s565] sm:$0xff]
        %v655 = vld [vmem:[%s565 + $0x8] sm:$0xff]
        %v656 = vld [vmem:[%s574] sm:$0xff]
        %v657 = vld [vmem:[%s574 + $0x8] sm:$0xff]
        %v658 = vld [vmem:[#allocation7] sm:$0xff]
        %v659 = vld [vmem:[#allocation7 + $0x8] sm:$0xff]
        %v660 = vld [vmem:[#allocation7 + $0x10] sm:$0xff]
        %v661 = vld [vmem:[#allocation7 + $0x18] sm:$0xff]
        %v662 = vld [vmem:[#allocation7 + $0x20] sm:$0xff]
        %v663 = vld [vmem:[#allocation7 + $0x28] sm:$0xff]
        %v664 = vld [vmem:[#allocation7 + $0x30] sm:$0xff]
        %v665 = vld [vmem:[#allocation7 + $0x38] sm:$0xff]
        %v666 = vld [vmem:[#allocation7 + $0x40] sm:$0xff]
        %v667 = vld [vmem:[#allocation7 + $0x48] sm:$0xff]
        %v668 = vld [vmem:[#allocation7 + $0x50] sm:$0xff]
        %v669 = vld [vmem:[#allocation7 + $0x58] sm:$0xff]
        %v670 = vld [vmem:[#allocation7 + $0x60] sm:$0xff]
        %v671 = vld [vmem:[#allocation7 + $0x68] sm:$0xff]
        %v672 = vld [vmem:[#allocation7 + $0x70] sm:$0xff]
        %v673 = vld [vmem:[#allocation7 + $0x78] sm:$0xff]
        %674 = vmatprep.subr.mxu0 0.0
        %675 = vmatpush1.msra.mxu0 %v658
        %676 = vmatprep.subr.mxu0 0.0
        %677 = vmatpush1.msra.mxu0 %v659
        %678 = vmatprep.subr.mxu0 0.0
        %679 = vmatpush1.msra.mxu0 %v660
        %680 = vmatprep.subr.mxu0 0.0
        %681 = vmatpush1.msra.mxu0 %v661
        %682 = vmatprep.subr.mxu0 0.0
        %683 = vmatpush1.msra.mxu0 %v662
        %684 = vmatprep.subr.mxu0 0.0
        %685 = vmatpush1.msra.mxu0 %v663
        %686 = vmatprep.subr.mxu0 0.0
        %687 = vmatpush1.msra.mxu0 %v664
        %688 = vmatprep.subr.mxu0 0.0
        %689 = vmatpush1.msra.mxu0 %v665
        %690 = vmatprep.subr.mxu0 0.0
        %691 = vmatpush1.msra.mxu0 %v666
        %692 = vmatprep.subr.mxu0 0.0
        %693 = vmatpush1.msra.mxu0 %v667
        %694 = vmatprep.subr.mxu0 0.0
        %695 = vmatpush1.msra.mxu0 %v668
        %696 = vmatprep.subr.mxu0 0.0
        %697 = vmatpush1.msra.mxu0 %v669
        %698 = vmatprep.subr.mxu0 0.0
        %699 = vmatpush1.msra.mxu0 %v670
        %700 = vmatprep.subr.mxu0 0.0
        %701 = vmatpush1.msra.mxu0 %v671
        %702 = vmatprep.subr.mxu0 0.0
        %703 = vmatpush1.msra.mxu0 %v672
        %704 = vmatprep.subr.mxu0 0.0
        %705 = vmatpush1.msra.mxu0 %v673
        %706 = vmatprep.subr.mxu0 0.0
        %707 = vmatpush1.msra.mxu0 0.0
        %708 = vmatprep.subr.mxu0 0.0
        %709 = vmatpush1.msra.mxu0 0.0
        %710 = vmatprep.subr.mxu0 0.0
        %711 = vmatpush1.msra.mxu0 0.0
        %712 = vmatprep.subr.mxu0 0.0
        %713 = vmatpush1.msra.mxu0 0.0
        %714 = vmatprep.subr.mxu0 0.0
        %715 = vmatpush1.msra.mxu0 0.0
        %716 = vmatprep.subr.mxu0 0.0
        %717 = vmatpush1.msra.mxu0 0.0
        %718 = vmatprep.subr.mxu0 0.0
        %719 = vmatpush1.msra.mxu0 0.0
        %720 = vmatprep.subr.mxu0 0.0
        %721 = vmatpush1.msra.mxu0 0.0
        %722 = vmatprep.subr.mxu0 0.0
        %723 = vmatpush1.msra.mxu0 0.0
        %724 = vmatprep.subr.mxu0 0.0
        %725 = vmatpush1.msra.mxu0 0.0
        %726 = vmatprep.subr.mxu0 0.0
        %727 = vmatpush1.msra.mxu0 0.0
        %728 = vmatprep.subr.mxu0 0.0
        %729 = vmatpush1.msra.mxu0 0.0
        %730 = vmatprep.subr.mxu0 0.0
        %731 = vmatpush1.msra.mxu0 0.0
        %732 = vmatprep.subr.mxu0 0.0
        %733 = vmatpush1.msra.mxu0 0.0
        %734 = vmatprep.subr.mxu0 0.0
        %735 = vmatpush1.msra.mxu0 0.0
        %736 = vmatprep.subr.mxu0 0.0
        %737 = vmatpush1.msra.mxu0 0.0
        %738 = vmatprep.mubr.f32.mxu0 0.0
        %739 = vmatmul.mubr.f32.gmra.mrb[0].mxu0 %v654
        %v740 = vpop.f32.mrb[0].mxu0
        %v741 = vadd.f32 0.0, %v740
        %v742 = vpop.f32.mrb[0].mxu0
        %743 = vmatprep.mubr.f32.mxu0 0.0
        %744 = vmatmul.mubr.f32.gmra.mrb[0].mxu0 %v655
        %v745 = vpop.f32.mrb[0].mxu0
        %v746 = vadd.f32 0.0, %v745
        %v747 = vpop.f32.mrb[0].mxu0
        %748 = vdwg.mxu0
        %vm749 = vcmask 130048
        %v751 = vsel %vm749, %v656, 0
        %v754 = vsel %vm749, %v657, 0
        %756 = vmatprep.subr.mxu0 0.0
        %757 = vmatpush1.msra.mxu0 %v741
        %758 = vmatprep.subr.mxu0 0.0
        %759 = vmatpush1.msra.mxu0 %v746
        %760 = vmatprep.subr.mxu0 0.0
        %761 = vmatpush1.msra.mxu0 0.0
        %762 = vmatprep.subr.mxu0 0.0
        %763 = vmatpush1.msra.mxu0 0.0
        %764 = vmatprep.subr.mxu0 0.0
        %765 = vmatpush1.msra.mxu0 0.0
        %766 = vmatprep.subr.mxu0 0.0
        %767 = vmatpush1.msra.mxu0 0.0
        %768 = vmatprep.subr.mxu0 0.0
        %769 = vmatpush1.msra.mxu0 0.0
        %770 = vmatprep.subr.mxu0 0.0
        %771 = vmatpush1.msra.mxu0 0.0
        %772 = vmatprep.subr.mxu0 0.0
        %773 = vmatpush1.msra.mxu0 0.0
        %774 = vmatprep.subr.mxu0 0.0
        %775 = vmatpush1.msra.mxu0 0.0
        %776 = vmatprep.subr.mxu0 0.0
        %777 = vmatpush1.msra.mxu0 0.0
        %778 = vmatprep.subr.mxu0 0.0
        %779 = vmatpush1.msra.mxu0 0.0
        %780 = vmatprep.subr.mxu0 0.0
        %781 = vmatpush1.msra.mxu0 0.0
        %782 = vmatprep.subr.mxu0 0.0
        %783 = vmatpush1.msra.mxu0 0.0
        %784 = vmatprep.subr.mxu0 0.0
        %785 = vmatpush1.msra.mxu0 0.0
        %786 = vmatprep.subr.mxu0 0.0
        %787 = vmatpush1.msra.mxu0 0.0
        %788 = vmatprep.subr.mxu0 0.0
        %789 = vmatpush1.msra.mxu0 0.0
        %790 = vmatprep.subr.mxu0 0.0
        %791 = vmatpush1.msra.mxu0 0.0
        %792 = vmatprep.subr.mxu0 0.0
        %793 = vmatpush1.msra.mxu0 0.0
        %794 = vmatprep.subr.mxu0 0.0
        %795 = vmatpush1.msra.mxu0 0.0
        %796 = vmatprep.subr.mxu0 0.0
        %797 = vmatpush1.msra.mxu0 0.0
        %798 = vmatprep.subr.mxu0 0.0
        %799 = vmatpush1.msra.mxu0 0.0
        %800 = vmatprep.subr.mxu0 0.0
        %801 = vmatpush1.msra.mxu0 0.0
        %802 = vmatprep.subr.mxu0 0.0
        %803 = vmatpush1.msra.mxu0 0.0
        %804 = vmatprep.subr.mxu0 0.0
        %805 = vmatpush1.msra.mxu0 0.0
        %806 = vmatprep.subr.mxu0 0.0
        %807 = vmatpush1.msra.mxu0 0.0
        %808 = vmatprep.subr.mxu0 0.0
        %809 = vmatpush1.msra.mxu0 0.0
        %810 = vmatprep.subr.mxu0 0.0
        %811 = vmatpush1.msra.mxu0 0.0
        %812 = vmatprep.subr.mxu0 0.0
        %813 = vmatpush1.msra.mxu0 0.0
        %814 = vmatprep.subr.mxu0 0.0
        %815 = vmatpush1.msra.mxu0 0.0
        %816 = vmatprep.subr.mxu0 0.0
        %817 = vmatpush1.msra.mxu0 0.0
        %818 = vmatprep.subr.mxu0 0.0
        %819 = vmatpush1.msra.mxu0 0.0
        %820 = vmatprep.mubr.f32.mxu0 0.0
        %821 = vmatmul.mubr.f32.gmra.mrb[0].mxu0 %v751
        %v822 = vpop.f32.mrb[0].mxu0
        %v823 = vadd.f32 0.0, %v822
        %v824 = vpop.f32.mrb[0].mxu0
        %825 = vmatprep.mubr.f32.mxu0 0.0
        %826 = vmatmul.mubr.f32.gmra.mrb[0].mxu0 %v754
        %v827 = vpop.f32.mrb[0].mxu0
        %v828 = vadd.f32 0.0, %v827
        %v829 = vpop.f32.mrb[0].mxu0
        %830 = vdwg.mxu0
        %v831 = vld [vmem:[#allocation8] sm:$0xff]
        %v832 = vld [vmem:[#allocation8 + $0x8] sm:$0xff]
        %v833 = vld [vmem:[#allocation8 + $0x10] sm:$0xff]
        %v834 = vld [vmem:[#allocation8 + $0x18] sm:$0xff]
        %v835 = vld [vmem:[#allocation8 + $0x20] sm:$0xff]
        %v836 = vld [vmem:[#allocation8 + $0x28] sm:$0xff]
        %v837 = vld [vmem:[#allocation8 + $0x30] sm:$0xff]
        %v838 = vld [vmem:[#allocation8 + $0x38] sm:$0xff]
        %v839 = vld [vmem:[#allocation8 + $0x40] sm:$0xff]
        %v840 = vld [vmem:[#allocation8 + $0x48] sm:$0xff]
        %v841 = vld [vmem:[#allocation8 + $0x50] sm:$0xff]
        %v842 = vld [vmem:[#allocation8 + $0x58] sm:$0xff]
        %v843 = vld [vmem:[#allocation8 + $0x60] sm:$0xff]
        %v844 = vld [vmem:[#allocation8 + $0x68] sm:$0xff]
        %v845 = vld [vmem:[#allocation8 + $0x70] sm:$0xff]
        %v846 = vld [vmem:[#allocation8 + $0x78] sm:$0xff]
        %v847 = vld [vmem:[%s4] sm:$0x1]
        %v849 = vlaneseq
        %v850 = vshrl.u32 %v849, 7
        %v851 = vsub.s32 0, %v850
        %v852 = vrot.slane %v847, %v851
        %854 = vmatprep.subr.mxu0 0.0
        %855 = vmatpush1.msra.mxu0 %v831
        %856 = vmatprep.subr.mxu0 0.0
        %857 = vmatpush1.msra.mxu0 %v832
        %858 = vmatprep.subr.mxu0 0.0
        %859 = vmatpush1.msra.mxu0 %v833
        %860 = vmatprep.subr.mxu0 0.0
        %861 = vmatpush1.msra.mxu0 %v834
        %862 = vmatprep.subr.mxu0 0.0
        %863 = vmatpush1.msra.mxu0 %v835
        %864 = vmatprep.subr.mxu0 0.0
        %865 = vmatpush1.msra.mxu0 %v836
        %866 = vmatprep.subr.mxu0 0.0
        %867 = vmatpush1.msra.mxu0 %v837
        %868 = vmatprep.subr.mxu0 0.0
        %869 = vmatpush1.msra.mxu0 %v838
        %870 = vmatprep.subr.mxu0 0.0
        %871 = vmatpush1.msra.mxu0 %v839
        %872 = vmatprep.subr.mxu0 0.0
        %873 = vmatpush1.msra.mxu0 %v840
        %874 = vmatprep.subr.mxu0 0.0
        %875 = vmatpush1.msra.mxu0 %v841
        %876 = vmatprep.subr.mxu0 0.0
        %877 = vmatpush1.msra.mxu0 %v842
        %878 = vmatprep.subr.mxu0 0.0
        %879 = vmatpush1.msra.mxu0 %v843
        %880 = vmatprep.subr.mxu0 0.0
        %881 = vmatpush1.msra.mxu0 %v844
        %882 = vmatprep.subr.mxu0 0.0
        %883 = vmatpush1.msra.mxu0 %v845
        %884 = vmatprep.subr.mxu0 0.0
        %885 = vmatpush1.msra.mxu0 %v846
        %886 = vmatprep.subr.mxu0 0.0
        %887 = vmatpush1.msra.mxu0 0.0
        %888 = vmatprep.subr.mxu0 0.0
        %889 = vmatpush1.msra.mxu0 0.0
        %890 = vmatprep.subr.mxu0 0.0
        %891 = vmatpush1.msra.mxu0 0.0
        %892 = vmatprep.subr.mxu0 0.0
        %893 = vmatpush1.msra.mxu0 0.0
        %894 = vmatprep.subr.mxu0 0.0
        %895 = vmatpush1.msra.mxu0 0.0
        %896 = vmatprep.subr.mxu0 0.0
        %897 = vmatpush1.msra.mxu0 0.0
        %898 = vmatprep.subr.mxu0 0.0
        %899 = vmatpush1.msra.mxu0 0.0
        %900 = vmatprep.subr.mxu0 0.0
        %901 = vmatpush1.msra.mxu0 0.0
        %902 = vmatprep.subr.mxu0 0.0
        %903 = vmatpush1.msra.mxu0 0.0
        %904 = vmatprep.subr.mxu0 0.0
        %905 = vmatpush1.msra.mxu0 0.0
        %906 = vmatprep.subr.mxu0 0.0
        %907 = vmatpush1.msra.mxu0 0.0
        %908 = vmatprep.subr.mxu0 0.0
        %909 = vmatpush1.msra.mxu0 0.0
        %910 = vmatprep.subr.mxu0 0.0
        %911 = vmatpush1.msra.mxu0 0.0
        %912 = vmatprep.subr.mxu0 0.0
        %913 = vmatpush1.msra.mxu0 0.0
        %914 = vmatprep.subr.mxu0 0.0
        %915 = vmatpush1.msra.mxu0 0.0
        %916 = vmatprep.subr.mxu0 0.0
        %917 = vmatpush1.msra.mxu0 0.0
        %918 = vmatprep.mubr.f32.mxu0 0.0
        %919 = vmatmul.mubr.f32.gmra.mrb[0].mxu0 %v823
        %v920 = vpop.f32.mrb[0].mxu0
        %v921 = vadd.f32 %v852, %v920
        %v922 = vpop.f32.mrb[0].mxu0
        %923 = vmatprep.mubr.f32.mxu0 0.0
        %924 = vmatmul.mubr.f32.gmra.mrb[0].mxu0 %v828
        %v925 = vpop.f32.mrb[0].mxu0
        %v926 = vadd.f32 %v852, %v925
        %v927 = vpop.f32.mrb[0].mxu0
        %928 = vdwg.mxu0
        %v929 = vmax.f32 %v921, 0.0
        %v930 = vmax.f32 %v926, 0.0
        %v931 = vld [vmem:[#allocation10] sm:$0xff]
        %v932 = vld [vmem:[#allocation10 + $0x8] sm:$0xff]
        %v933 = vld [vmem:[#allocation10 + $0x10] sm:$0xff]
        %v934 = vld [vmem:[#allocation10 + $0x18] sm:$0xff]
        %v935 = vld [vmem:[#allocation10 + $0x20] sm:$0xff]
        %v936 = vld [vmem:[#allocation10 + $0x28] sm:$0xff]
        %v937 = vld [vmem:[#allocation10 + $0x30] sm:$0xff]
        %v938 = vld [vmem:[#allocation10 + $0x38] sm:$0xff]
        %v939 = vld [vmem:[#allocation10 + $0x40] sm:$0xff]
        %v940 = vld [vmem:[#allocation10 + $0x48] sm:$0xff]
        %v941 = vld [vmem:[#allocation10 + $0x50] sm:$0xff]
        %v942 = vld [vmem:[#allocation10 + $0x58] sm:$0xff]
        %v943 = vld [vmem:[#allocation10 + $0x60] sm:$0xff]
        %v944 = vld [vmem:[#allocation10 + $0x68] sm:$0xff]
        %v945 = vld [vmem:[#allocation10 + $0x70] sm:$0xff]
        %v946 = vld [vmem:[#allocation10 + $0x78] sm:$0xff]
        %v947 = vld [vmem:[%s6] sm:$0x1]
        %v949 = vlaneseq
        %v950 = vshrl.u32 %v949, 7
        %v951 = vsub.s32 0, %v950
        %v952 = vrot.slane %v947, %v951
        %954 = vmatprep.subr.mxu0 0.0
        %955 = vmatpush1.msra.mxu0 %v931
        %956 = vmatprep.subr.mxu0 0.0
        %957 = vmatpush1.msra.mxu0 %v932
        %958 = vmatprep.subr.mxu0 0.0
        %959 = vmatpush1.msra.mxu0 %v933
        %960 = vmatprep.subr.mxu0 0.0
        %961 = vmatpush1.msra.mxu0 %v934
        %962 = vmatprep.subr.mxu0 0.0
        %963 = vmatpush1.msra.mxu0 %v935
        %964 = vmatprep.subr.mxu0 0.0
        %965 = vmatpush1.msra.mxu0 %v936
        %966 = vmatprep.subr.mxu0 0.0
        %967 = vmatpush1.msra.mxu0 %v937
        %968 = vmatprep.subr.mxu0 0.0
        %969 = vmatpush1.msra.mxu0 %v938
        %970 = vmatprep.subr.mxu0 0.0
        %971 = vmatpush1.msra.mxu0 %v939
        %972 = vmatprep.subr.mxu0 0.0
        %973 = vmatpush1.msra.mxu0 %v940
        %974 = vmatprep.subr.mxu0 0.0
        %975 = vmatpush1.msra.mxu0 %v941
        %976 = vmatprep.subr.mxu0 0.0
        %977 = vmatpush1.msra.mxu0 %v942
        %978 = vmatprep.subr.mxu0 0.0
        %979 = vmatpush1.msra.mxu0 %v943
        %980 = vmatprep.subr.mxu0 0.0
        %981 = vmatpush1.msra.mxu0 %v944
        %982 = vmatprep.subr.mxu0 0.0
        %983 = vmatpush1.msra.mxu0 %v945
        %984 = vmatprep.subr.mxu0 0.0
        %985 = vmatpush1.msra.mxu0 %v946
        %986 = vmatprep.subr.mxu0 0.0
        %987 = vmatpush1.msra.mxu0 0.0
        %988 = vmatprep.subr.mxu0 0.0
        %989 = vmatpush1.msra.mxu0 0.0
        %990 = vmatprep.subr.mxu0 0.0
        %991 = vmatpush1.msra.mxu0 0.0
        %992 = vmatprep.subr.mxu0 0.0
        %993 = vmatpush1.msra.mxu0 0.0
        %994 = vmatprep.subr.mxu0 0.0
        %995 = vmatpush1.msra.mxu0 0.0
        %996 = vmatprep.subr.mxu0 0.0
        %997 = vmatpush1.msra.mxu0 0.0
        %998 = vmatprep.subr.mxu0 0.0
        %999 = vmatpush1.msra.mxu0 0.0
        %1000 = vmatprep.subr.mxu0 0.0
        %1001 = vmatpush1.msra.mxu0 0.0
        %1002 = vmatprep.subr.mxu0 0.0
        %1003 = vmatpush1.msra.mxu0 0.0
        %1004 = vmatprep.subr.mxu0 0.0
        %1005 = vmatpush1.msra.mxu0 0.0
        %1006 = vmatprep.subr.mxu0 0.0
        %1007 = vmatpush1.msra.mxu0 0.0
        %1008 = vmatprep.subr.mxu0 0.0
        %1009 = vmatpush1.msra.mxu0 0.0
        %1010 = vmatprep.subr.mxu0 0.0
        %1011 = vmatpush1.msra.mxu0 0.0
        %1012 = vmatprep.subr.mxu0 0.0
        %1013 = vmatpush1.msra.mxu0 0.0
        %1014 = vmatprep.subr.mxu0 0.0
        %1015 = vmatpush1.msra.mxu0 0.0
        %1016 = vmatprep.subr.mxu0 0.0
        %1017 = vmatpush1.msra.mxu0 0.0
        %1018 = vmatprep.mubr.f32.mxu0 0.0
        %1019 = vmatmul.mubr.f32.gmra.mrb[0].mxu0 %v741
        %v1020 = vpop.f32.mrb[0].mxu0
        %v1021 = vadd.f32 %v952, %v1020
        %v1022 = vpop.f32.mrb[0].mxu0
        %1023 = vmatprep.mubr.f32.mxu0 0.0
        %1024 = vmatmul.mubr.f32.gmra.mrb[0].mxu0 %v746
        %v1025 = vpop.f32.mrb[0].mxu0
        %v1026 = vadd.f32 %v952, %v1025
        %v1027 = vpop.f32.mrb[0].mxu0
        %1028 = vdwg.mxu0
        %v1029 = vmax.f32 %v1021, 0.0
        %v1030 = vmax.f32 %v1026, 0.0
        %v1031 = vadd.f32 %v929, %v1029
        %v1032 = vadd.f32 %v930, %v1030
        %1033 = vmatprep.subr.mxu0 0.0
        %1034 = vmatpush1.msra.mxu0 %v1031
        %1035 = vmatprep.subr.mxu0 0.0
        %1036 = vmatpush1.msra.mxu0 %v1032
        %1037 = vmatprep.subr.mxu0 0.0
        %1038 = vmatpush1.msra.mxu0 0.0
        %1039 = vmatprep.subr.mxu0 0.0
        %1040 = vmatpush1.msra.mxu0 0.0
        %1041 = vmatprep.subr.mxu0 0.0
        %1042 = vmatpush1.msra.mxu0 0.0
        %1043 = vmatprep.subr.mxu0 0.0
        %1044 = vmatpush1.msra.mxu0 0.0
        %1045 = vmatprep.subr.mxu0 0.0
        %1046 = vmatpush1.msra.mxu0 0.0
        %1047 = vmatprep.subr.mxu0 0.0
        %1048 = vmatpush1.msra.mxu0 0.0
        %1049 = vmatprep.subr.mxu0 0.0
        %1050 = vmatpush1.msra.mxu0 0.0
        %1051 = vmatprep.subr.mxu0 0.0
        %1052 = vmatpush1.msra.mxu0 0.0
        %1053 = vmatprep.subr.mxu0 0.0
        %1054 = vmatpush1.msra.mxu0 0.0
        %1055 = vmatprep.subr.mxu0 0.0
        %1056 = vmatpush1.msra.mxu0 0.0
        %1057 = vmatprep.subr.mxu0 0.0
        %1058 = vmatpush1.msra.mxu0 0.0
        %1059 = vmatprep.subr.mxu0 0.0
        %1060 = vmatpush1.msra.mxu0 0.0
        %1061 = vmatprep.subr.mxu0 0.0
        %1062 = vmatpush1.msra.mxu0 0.0
        %1063 = vmatprep.subr.mxu0 0.0
        %1064 = vmatpush1.msra.mxu0 0.0
        %1065 = vmatprep.subr.mxu0 0.0
        %1066 = vmatpush1.msra.mxu0 0.0
        %1067 = vmatprep.subr.mxu0 0.0
        %1068 = vmatpush1.msra.mxu0 0.0
        %1069 = vmatprep.subr.mxu0 0.0
        %1070 = vmatpush1.msra.mxu0 0.0
        %1071 = vmatprep.subr.mxu0 0.0
        %1072 = vmatpush1.msra.mxu0 0.0
        %1073 = vmatprep.subr.mxu0 0.0
        %1074 = vmatpush1.msra.mxu0 0.0
        %1075 = vmatprep.subr.mxu0 0.0
        %1076 = vmatpush1.msra.mxu0 0.0
        %1077 = vmatprep.subr.mxu0 0.0
        %1078 = vmatpush1.msra.mxu0 0.0
        %1079 = vmatprep.subr.mxu0 0.0
        %1080 = vmatpush1.msra.mxu0 0.0
        %1081 = vmatprep.subr.mxu0 0.0
        %1082 = vmatpush1.msra.mxu0 0.0
        %1083 = vmatprep.subr.mxu0 0.0
        %1084 = vmatpush1.msra.mxu0 0.0
        %1085 = vmatprep.subr.mxu0 0.0
        %1086 = vmatpush1.msra.mxu0 0.0
        %1087 = vmatprep.subr.mxu0 0.0
        %1088 = vmatpush1.msra.mxu0 0.0
        %1089 = vmatprep.subr.mxu0 0.0
        %1090 = vmatpush1.msra.mxu0 0.0
        %1091 = vmatprep.subr.mxu0 0.0
        %1092 = vmatpush1.msra.mxu0 0.0
        %1093 = vmatprep.subr.mxu0 0.0
        %1094 = vmatpush1.msra.mxu0 0.0
        %1095 = vmatprep.subr.mxu0 0.0
        %1096 = vmatpush1.msra.mxu0 0.0
        %1097 = vmatprep.mubr.f32.mxu0 0.0
        %1098 = vmatmul.mubr.f32.gmra.mrb[0].mxu0 %v751
        %v1099 = vpop.f32.mrb[0].mxu0
        %v1100 = vadd.f32 0.0, %v1099
        %v1101 = vpop.f32.mrb[0].mxu0
        %1102 = vmatprep.mubr.f32.mxu0 0.0
        %1103 = vmatmul.mubr.f32.gmra.mrb[0].mxu0 %v754
        %v1104 = vpop.f32.mrb[0].mxu0
        %v1105 = vadd.f32 0.0, %v1104
        %v1106 = vpop.f32.mrb[0].mxu0
        %1107 = vdwg.mxu0
        %v1108 = vld [vmem:[#allocation11] sm:$0xff]
        %v1109 = vld [vmem:[#allocation11 + $0x8] sm:$0xff]
        %v1110 = vld [vmem:[#allocation11 + $0x10] sm:$0xff]
        %v1111 = vld [vmem:[#allocation11 + $0x18] sm:$0xff]
        %v1112 = vld [vmem:[#allocation11 + $0x20] sm:$0xff]
        %v1113 = vld [vmem:[#allocation11 + $0x28] sm:$0xff]
        %v1114 = vld [vmem:[#allocation11 + $0x30] sm:$0xff]
        %v1115 = vld [vmem:[#allocation11 + $0x38] sm:$0xff]
        %v1116 = vld [vmem:[#allocation11 + $0x40] sm:$0xff]
        %v1117 = vld [vmem:[#allocation11 + $0x48] sm:$0xff]
        %v1118 = vld [vmem:[#allocation11 + $0x50] sm:$0xff]
        %v1119 = vld [vmem:[#allocation11 + $0x58] sm:$0xff]
        %v1120 = vld [vmem:[#allocation11 + $0x60] sm:$0xff]
        %v1121 = vld [vmem:[#allocation11 + $0x68] sm:$0xff]
        %v1122 = vld [vmem:[#allocation11 + $0x70] sm:$0xff]
        %v1123 = vld [vmem:[#allocation11 + $0x78] sm:$0xff]
        %v1124 = vld [vmem:[%s8] sm:$0x1]
        %v1126 = vlaneseq
        %v1127 = vshrl.u32 %v1126, 7
        %v1128 = vsub.s32 0, %v1127
        %v1129 = vrot.slane %v1124, %v1128
        %1131 = vmatprep.subr.mxu0 0.0
        %1132 = vmatpush1.msra.mxu0 %v1108
        %1133 = vmatprep.subr.mxu0 0.0
        %1134 = vmatpush1.msra.mxu0 %v1109
        %1135 = vmatprep.subr.mxu0 0.0
        %1136 = vmatpush1.msra.mxu0 %v1110
        %1137 = vmatprep.subr.mxu0 0.0
        %1138 = vmatpush1.msra.mxu0 %v1111
        %1139 = vmatprep.subr.mxu0 0.0
        %1140 = vmatpush1.msra.mxu0 %v1112
        %1141 = vmatprep.subr.mxu0 0.0
        %1142 = vmatpush1.msra.mxu0 %v1113
        %1143 = vmatprep.subr.mxu0 0.0
        %1144 = vmatpush1.msra.mxu0 %v1114
        %1145 = vmatprep.subr.mxu0 0.0
        %1146 = vmatpush1.msra.mxu0 %v1115
        %1147 = vmatprep.subr.mxu0 0.0
        %1148 = vmatpush1.msra.mxu0 %v1116
        %1149 = vmatprep.subr.mxu0 0.0
        %1150 = vmatpush1.msra.mxu0 %v1117
        %1151 = vmatprep.subr.mxu0 0.0
        %1152 = vmatpush1.msra.mxu0 %v1118
        %1153 = vmatprep.subr.mxu0 0.0
        %1154 = vmatpush1.msra.mxu0 %v1119
        %1155 = vmatprep.subr.mxu0 0.0
        %1156 = vmatpush1.msra.mxu0 %v1120
        %1157 = vmatprep.subr.mxu0 0.0
        %1158 = vmatpush1.msra.mxu0 %v1121
        %1159 = vmatprep.subr.mxu0 0.0
        %1160 = vmatpush1.msra.mxu0 %v1122
        %1161 = vmatprep.subr.mxu0 0.0
        %1162 = vmatpush1.msra.mxu0 %v1123
        %1163 = vmatprep.subr.mxu0 0.0
        %1164 = vmatpush1.msra.mxu0 0.0
        %1165 = vmatprep.subr.mxu0 0.0
        %1166 = vmatpush1.msra.mxu0 0.0
        %1167 = vmatprep.subr.mxu0 0.0
        %1168 = vmatpush1.msra.mxu0 0.0
        %1169 = vmatprep.subr.mxu0 0.0
        %1170 = vmatpush1.msra.mxu0 0.0
        %1171 = vmatprep.subr.mxu0 0.0
        %1172 = vmatpush1.msra.mxu0 0.0
        %1173 = vmatprep.subr.mxu0 0.0
        %1174 = vmatpush1.msra.mxu0 0.0
        %1175 = vmatprep.subr.mxu0 0.0
        %1176 = vmatpush1.msra.mxu0 0.0
        %1177 = vmatprep.subr.mxu0 0.0
        %1178 = vmatpush1.msra.mxu0 0.0
        %1179 = vmatprep.subr.mxu0 0.0
        %1180 = vmatpush1.msra.mxu0 0.0
        %1181 = vmatprep.subr.mxu0 0.0
        %1182 = vmatpush1.msra.mxu0 0.0
        %1183 = vmatprep.subr.mxu0 0.0
        %1184 = vmatpush1.msra.mxu0 0.0
        %1185 = vmatprep.subr.mxu0 0.0
        %1186 = vmatpush1.msra.mxu0 0.0
        %1187 = vmatprep.subr.mxu0 0.0
        %1188 = vmatpush1.msra.mxu0 0.0
        %1189 = vmatprep.subr.mxu0 0.0
        %1190 = vmatpush1.msra.mxu0 0.0
        %1191 = vmatprep.subr.mxu0 0.0
        %1192 = vmatpush1.msra.mxu0 0.0
        %1193 = vmatprep.subr.mxu0 0.0
        %1194 = vmatpush1.msra.mxu0 0.0
        %1195 = vmatprep.mubr.f32.mxu0 0.0
        %1196 = vmatmul.mubr.f32.gmra.mrb[0].mxu0 %v1100
        %v1197 = vpop.f32.mrb[0].mxu0
        %v1198 = vadd.f32 %v1129, %v1197
        %v1199 = vpop.f32.mrb[0].mxu0
        %1200 = vmatprep.mubr.f32.mxu0 0.0
        %1201 = vmatmul.mubr.f32.gmra.mrb[0].mxu0 %v1105
        %v1202 = vpop.f32.mrb[0].mxu0
        %v1203 = vadd.f32 %v1129, %v1202
        %v1204 = vpop.f32.mrb[0].mxu0
        %1205 = vdwg.mxu0
        %v1206 = vmax.f32 %v1198, 0.0
        %v1207 = vmax.f32 %v1203, 0.0
        %v1208 = vld [vmem:[#allocation13] sm:$0xff]
        %v1209 = vld [vmem:[#allocation13 + $0x8] sm:$0xff]
        %v1210 = vld [vmem:[#allocation13 + $0x10] sm:$0xff]
        %v1211 = vld [vmem:[#allocation13 + $0x18] sm:$0xff]
        %v1212 = vld [vmem:[#allocation13 + $0x20] sm:$0xff]
        %v1213 = vld [vmem:[#allocation13 + $0x28] sm:$0xff]
        %v1214 = vld [vmem:[#allocation13 + $0x30] sm:$0xff]
        %v1215 = vld [vmem:[#allocation13 + $0x38] sm:$0xff]
        %v1216 = vld [vmem:[#allocation13 + $0x40] sm:$0xff]
        %v1217 = vld [vmem:[#allocation13 + $0x48] sm:$0xff]
        %v1218 = vld [vmem:[#allocation13 + $0x50] sm:$0xff]
        %v1219 = vld [vmem:[#allocation13 + $0x58] sm:$0xff]
        %v1220 = vld [vmem:[#allocation13 + $0x60] sm:$0xff]
        %v1221 = vld [vmem:[#allocation13 + $0x68] sm:$0xff]
        %v1222 = vld [vmem:[#allocation13 + $0x70] sm:$0xff]
        %v1223 = vld [vmem:[#allocation13 + $0x78] sm:$0xff]
        %v1224 = vld [vmem:[%s10] sm:$0x1]
        %v1226 = vlaneseq
        %v1227 = vshrl.u32 %v1226, 7
        %v1228 = vsub.s32 0, %v1227
        %v1229 = vrot.slane %v1224, %v1228
        %1231 = vmatprep.subr.mxu0 0.0
        %1232 = vmatpush1.msra.mxu0 %v1208
        %1233 = vmatprep.subr.mxu0 0.0
        %1234 = vmatpush1.msra.mxu0 %v1209
        %1235 = vmatprep.subr.mxu0 0.0
        %1236 = vmatpush1.msra.mxu0 %v1210
        %1237 = vmatprep.subr.mxu0 0.0
        %1238 = vmatpush1.msra.mxu0 %v1211
        %1239 = vmatprep.subr.mxu0 0.0
        %1240 = vmatpush1.msra.mxu0 %v1212
        %1241 = vmatprep.subr.mxu0 0.0
        %1242 = vmatpush1.msra.mxu0 %v1213
        %1243 = vmatprep.subr.mxu0 0.0
        %1244 = vmatpush1.msra.mxu0 %v1214
        %1245 = vmatprep.subr.mxu0 0.0
        %1246 = vmatpush1.msra.mxu0 %v1215
        %1247 = vmatprep.subr.mxu0 0.0
        %1248 = vmatpush1.msra.mxu0 %v1216
        %1249 = vmatprep.subr.mxu0 0.0
        %1250 = vmatpush1.msra.mxu0 %v1217
        %1251 = vmatprep.subr.mxu0 0.0
        %1252 = vmatpush1.msra.mxu0 %v1218
        %1253 = vmatprep.subr.mxu0 0.0
        %1254 = vmatpush1.msra.mxu0 %v1219
        %1255 = vmatprep.subr.mxu0 0.0
        %1256 = vmatpush1.msra.mxu0 %v1220
        %1257 = vmatprep.subr.mxu0 0.0
        %1258 = vmatpush1.msra.mxu0 %v1221
        %1259 = vmatprep.subr.mxu0 0.0
        %1260 = vmatpush1.msra.mxu0 %v1222
        %1261 = vmatprep.subr.mxu0 0.0
        %1262 = vmatpush1.msra.mxu0 %v1223
        %1263 = vmatprep.subr.mxu0 0.0
        %1264 = vmatpush1.msra.mxu0 0.0
        %1265 = vmatprep.subr.mxu0 0.0
        %1266 = vmatpush1.msra.mxu0 0.0
        %1267 = vmatprep.subr.mxu0 0.0
        %1268 = vmatpush1.msra.mxu0 0.0
        %1269 = vmatprep.subr.mxu0 0.0
        %1270 = vmatpush1.msra.mxu0 0.0
        %1271 = vmatprep.subr.mxu0 0.0
        %1272 = vmatpush1.msra.mxu0 0.0
        %1273 = vmatprep.subr.mxu0 0.0
        %1274 = vmatpush1.msra.mxu0 0.0
        %1275 = vmatprep.subr.mxu0 0.0
        %1276 = vmatpush1.msra.mxu0 0.0
        %1277 = vmatprep.subr.mxu0 0.0
        %1278 = vmatpush1.msra.mxu0 0.0
        %1279 = vmatprep.subr.mxu0 0.0
        %1280 = vmatpush1.msra.mxu0 0.0
        %1281 = vmatprep.subr.mxu0 0.0
        %1282 = vmatpush1.msra.mxu0 0.0
        %1283 = vmatprep.subr.mxu0 0.0
        %1284 = vmatpush1.msra.mxu0 0.0
        %1285 = vmatprep.subr.mxu0 0.0
        %1286 = vmatpush1.msra.mxu0 0.0
        %1287 = vmatprep.subr.mxu0 0.0
        %1288 = vmatpush1.msra.mxu0 0.0
        %1289 = vmatprep.subr.mxu0 0.0
        %1290 = vmatpush1.msra.mxu0 0.0
        %1291 = vmatprep.subr.mxu0 0.0
        %1292 = vmatpush1.msra.mxu0 0.0
        %1293 = vmatprep.subr.mxu0 0.0
        %1294 = vmatpush1.msra.mxu0 0.0
        %1295 = vmatprep.mubr.f32.mxu0 0.0
        %1296 = vmatmul.mubr.f32.gmra.mrb[0].mxu0 %v1031
        %v1297 = vpop.f32.mrb[0].mxu0
        %v1298 = vadd.f32 %v1229, %v1297
        %v1299 = vpop.f32.mrb[0].mxu0
        %1300 = vmatprep.mubr.f32.mxu0 0.0
        %1301 = vmatmul.mubr.f32.gmra.mrb[0].mxu0 %v1032
        %v1302 = vpop.f32.mrb[0].mxu0
        %v1303 = vadd.f32 %v1229, %v1302
        %v1304 = vpop.f32.mrb[0].mxu0
        %1305 = vdwg.mxu0
        %v1306 = vmax.f32 %v1298, 0.0
        %v1307 = vmax.f32 %v1303, 0.0
        %v1308 = vadd.f32 %v1206, %v1306
        %v1309 = vadd.f32 %v1207, %v1307
        %1310 = vmatprep.subr.mxu0 0.0
        %1311 = vmatpush1.msra.mxu0 %v1308
        %1312 = vmatprep.subr.mxu0 0.0
        %1313 = vmatpush1.msra.mxu0 %v1309
        %1314 = vmatprep.subr.mxu0 0.0
        %1315 = vmatpush1.msra.mxu0 0.0
        %1316 = vmatprep.subr.mxu0 0.0
        %1317 = vmatpush1.msra.mxu0 0.0
        %1318 = vmatprep.subr.mxu0 0.0
        %1319 = vmatpush1.msra.mxu0 0.0
        %1320 = vmatprep.subr.mxu0 0.0
        %1321 = vmatpush1.msra.mxu0 0.0
        %1322 = vmatprep.subr.mxu0 0.0
        %1323 = vmatpush1.msra.mxu0 0.0
        %1324 = vmatprep.subr.mxu0 0.0
        %1325 = vmatpush1.msra.mxu0 0.0
        %1326 = vmatprep.subr.mxu0 0.0
        %1327 = vmatpush1.msra.mxu0 0.0
        %1328 = vmatprep.subr.mxu0 0.0
        %1329 = vmatpush1.msra.mxu0 0.0
        %1330 = vmatprep.subr.mxu0 0.0
        %1331 = vmatpush1.msra.mxu0 0.0
        %1332 = vmatprep.subr.mxu0 0.0
        %1333 = vmatpush1.msra.mxu0 0.0
        %1334 = vmatprep.subr.mxu0 0.0
        %1335 = vmatpush1.msra.mxu0 0.0
        %1336 = vmatprep.subr.mxu0 0.0
        %1337 = vmatpush1.msra.mxu0 0.0
        %1338 = vmatprep.subr.mxu0 0.0
        %1339 = vmatpush1.msra.mxu0 0.0
        %1340 = vmatprep.subr.mxu0 0.0
        %1341 = vmatpush1.msra.mxu0 0.0
        %1342 = vmatprep.subr.mxu0 0.0
        %1343 = vmatpush1.msra.mxu0 0.0
        %1344 = vmatprep.subr.mxu0 0.0
        %1345 = vmatpush1.msra.mxu0 0.0
        %1346 = vmatprep.subr.mxu0 0.0
        %1347 = vmatpush1.msra.mxu0 0.0
        %1348 = vmatprep.subr.mxu0 0.0
        %1349 = vmatpush1.msra.mxu0 0.0
        %1350 = vmatprep.subr.mxu0 0.0
        %1351 = vmatpush1.msra.mxu0 0.0
        %1352 = vmatprep.subr.mxu0 0.0
        %1353 = vmatpush1.msra.mxu0 0.0
        %1354 = vmatprep.subr.mxu0 0.0
        %1355 = vmatpush1.msra.mxu0 0.0
        %1356 = vmatprep.subr.mxu0 0.0
        %1357 = vmatpush1.msra.mxu0 0.0
        %1358 = vmatprep.subr.mxu0 0.0
        %1359 = vmatpush1.msra.mxu0 0.0
        %1360 = vmatprep.subr.mxu0 0.0
        %1361 = vmatpush1.msra.mxu0 0.0
        %1362 = vmatprep.subr.mxu0 0.0
        %1363 = vmatpush1.msra.mxu0 0.0
        %1364 = vmatprep.subr.mxu0 0.0
        %1365 = vmatpush1.msra.mxu0 0.0
        %1366 = vmatprep.subr.mxu0 0.0
        %1367 = vmatpush1.msra.mxu0 0.0
        %1368 = vmatprep.subr.mxu0 0.0
        %1369 = vmatpush1.msra.mxu0 0.0
        %1370 = vmatprep.subr.mxu0 0.0
        %1371 = vmatpush1.msra.mxu0 0.0
        %1372 = vmatprep.subr.mxu0 0.0
        %1373 = vmatpush1.msra.mxu0 0.0
        %1374 = vmatprep.mubr.f32.mxu0 0.0
        %1375 = vmatmul.mubr.f32.gmra.mrb[0].mxu0 %v751
        %v1376 = vpop.f32.mrb[0].mxu0
        %v1377 = vadd.f32 0.0, %v1376
        %v1378 = vpop.f32.mrb[0].mxu0
        %1379 = vmatprep.mubr.f32.mxu0 0.0
        %1380 = vmatmul.mubr.f32.gmra.mrb[0].mxu0 %v754
        %v1381 = vpop.f32.mrb[0].mxu0
        %v1382 = vadd.f32 0.0, %v1381
        %v1383 = vpop.f32.mrb[0].mxu0
        %1384 = vdwg.mxu0
        %v1385 = vld [vmem:[#allocation14] sm:$0xff]
        %v1386 = vld [vmem:[#allocation14 + $0x8] sm:$0xff]
        %v1387 = vld [vmem:[#allocation14 + $0x10] sm:$0xff]
        %v1388 = vld [vmem:[#allocation14 + $0x18] sm:$0xff]
        %v1389 = vld [vmem:[#allocation14 + $0x20] sm:$0xff]
        %v1390 = vld [vmem:[#allocation14 + $0x28] sm:$0xff]
        %v1391 = vld [vmem:[#allocation14 + $0x30] sm:$0xff]
        %v1392 = vld [vmem:[#allocation14 + $0x38] sm:$0xff]
        %v1393 = vld [vmem:[#allocation14 + $0x40] sm:$0xff]
        %v1394 = vld [vmem:[#allocation14 + $0x48] sm:$0xff]
        %v1395 = vld [vmem:[#allocation14 + $0x50] sm:$0xff]
        %v1396 = vld [vmem:[#allocation14 + $0x58] sm:$0xff]
        %v1397 = vld [vmem:[#allocation14 + $0x60] sm:$0xff]
        %v1398 = vld [vmem:[#allocation14 + $0x68] sm:$0xff]
        %v1399 = vld [vmem:[#allocation14 + $0x70] sm:$0xff]
        %v1400 = vld [vmem:[#allocation14 + $0x78] sm:$0xff]
        %v1401 = vld [vmem:[%s12] sm:$0x1]
        %v1403 = vlaneseq
        %v1404 = vshrl.u32 %v1403, 7
        %v1405 = vsub.s32 0, %v1404
        %v1406 = vrot.slane %v1401, %v1405
        %1408 = vmatprep.subr.mxu0 0.0
        %1409 = vmatpush1.msra.mxu0 %v1385
        %1410 = vmatprep.subr.mxu0 0.0
        %1411 = vmatpush1.msra.mxu0 %v1386
        %1412 = vmatprep.subr.mxu0 0.0
        %1413 = vmatpush1.msra.mxu0 %v1387
        %1414 = vmatprep.subr.mxu0 0.0
        %1415 = vmatpush1.msra.mxu0 %v1388
        %1416 = vmatprep.subr.mxu0 0.0
        %1417 = vmatpush1.msra.mxu0 %v1389
        %1418 = vmatprep.subr.mxu0 0.0
        %1419 = vmatpush1.msra.mxu0 %v1390
        %1420 = vmatprep.subr.mxu0 0.0
        %1421 = vmatpush1.msra.mxu0 %v1391
        %1422 = vmatprep.subr.mxu0 0.0
        %1423 = vmatpush1.msra.mxu0 %v1392
        %1424 = vmatprep.subr.mxu0 0.0
        %1425 = vmatpush1.msra.mxu0 %v1393
        %1426 = vmatprep.subr.mxu0 0.0
        %1427 = vmatpush1.msra.mxu0 %v1394
        %1428 = vmatprep.subr.mxu0 0.0
        %1429 = vmatpush1.msra.mxu0 %v1395
        %1430 = vmatprep.subr.mxu0 0.0
        %1431 = vmatpush1.msra.mxu0 %v1396
        %1432 = vmatprep.subr.mxu0 0.0
        %1433 = vmatpush1.msra.mxu0 %v1397
        %1434 = vmatprep.subr.mxu0 0.0
        %1435 = vmatpush1.msra.mxu0 %v1398
        %1436 = vmatprep.subr.mxu0 0.0
        %1437 = vmatpush1.msra.mxu0 %v1399
        %1438 = vmatprep.subr.mxu0 0.0
        %1439 = vmatpush1.msra.mxu0 %v1400
        %1440 = vmatprep.subr.mxu0 0.0
        %1441 = vmatpush1.msra.mxu0 0.0
        %1442 = vmatprep.subr.mxu0 0.0
        %1443 = vmatpush1.msra.mxu0 0.0
        %1444 = vmatprep.subr.mxu0 0.0
        %1445 = vmatpush1.msra.mxu0 0.0
        %1446 = vmatprep.subr.mxu0 0.0
        %1447 = vmatpush1.msra.mxu0 0.0
        %1448 = vmatprep.subr.mxu0 0.0
        %1449 = vmatpush1.msra.mxu0 0.0
        %1450 = vmatprep.subr.mxu0 0.0
        %1451 = vmatpush1.msra.mxu0 0.0
        %1452 = vmatprep.subr.mxu0 0.0
        %1453 = vmatpush1.msra.mxu0 0.0
        %1454 = vmatprep.subr.mxu0 0.0
        %1455 = vmatpush1.msra.mxu0 0.0
        %1456 = vmatprep.subr.mxu0 0.0
        %1457 = vmatpush1.msra.mxu0 0.0
        %1458 = vmatprep.subr.mxu0 0.0
        %1459 = vmatpush1.msra.mxu0 0.0
        %1460 = vmatprep.subr.mxu0 0.0
        %1461 = vmatpush1.msra.mxu0 0.0
        %1462 = vmatprep.subr.mxu0 0.0
        %1463 = vmatpush1.msra.mxu0 0.0
        %1464 = vmatprep.subr.mxu0 0.0
        %1465 = vmatpush1.msra.mxu0 0.0
        %1466 = vmatprep.subr.mxu0 0.0
        %1467 = vmatpush1.msra.mxu0 0.0
        %1468 = vmatprep.subr.mxu0 0.0
        %1469 = vmatpush1.msra.mxu0 0.0
        %1470 = vmatprep.subr.mxu0 0.0
        %1471 = vmatpush1.msra.mxu0 0.0
        %1472 = vmatprep.mubr.f32.mxu0 0.0
        %1473 = vmatmul.mubr.f32.gmra.mrb[0].mxu0 %v1377
        %v1474 = vpop.f32.mrb[0].mxu0
        %v1475 = vadd.f32 %v1406, %v1474
        %v1476 = vpop.f32.mrb[0].mxu0
        %1477 = vmatprep.mubr.f32.mxu0 0.0
        %1478 = vmatmul.mubr.f32.gmra.mrb[0].mxu0 %v1382
        %v1479 = vpop.f32.mrb[0].mxu0
        %v1480 = vadd.f32 %v1406, %v1479
        %v1481 = vpop.f32.mrb[0].mxu0
        %1482 = vdwg.mxu0
        %v1483 = vmax.f32 %v1475, 0.0
        %v1484 = vmax.f32 %v1480, 0.0
        %v1485 = vld [vmem:[#allocation16] sm:$0xff]
        %v1486 = vld [vmem:[#allocation16 + $0x8] sm:$0xff]
        %v1487 = vld [vmem:[#allocation16 + $0x10] sm:$0xff]
        %v1488 = vld [vmem:[#allocation16 + $0x18] sm:$0xff]
        %v1489 = vld [vmem:[#allocation16 + $0x20] sm:$0xff]
        %v1490 = vld [vmem:[#allocation16 + $0x28] sm:$0xff]
        %v1491 = vld [vmem:[#allocation16 + $0x30] sm:$0xff]
        %v1492 = vld [vmem:[#allocation16 + $0x38] sm:$0xff]
        %v1493 = vld [vmem:[#allocation16 + $0x40] sm:$0xff]
        %v1494 = vld [vmem:[#allocation16 + $0x48] sm:$0xff]
        %v1495 = vld [vmem:[#allocation16 + $0x50] sm:$0xff]
        %v1496 = vld [vmem:[#allocation16 + $0x58] sm:$0xff]
        %v1497 = vld [vmem:[#allocation16 + $0x60] sm:$0xff]
        %v1498 = vld [vmem:[#allocation16 + $0x68] sm:$0xff]
        %v1499 = vld [vmem:[#allocation16 + $0x70] sm:$0xff]
        %v1500 = vld [vmem:[#allocation16 + $0x78] sm:$0xff]
        %v1501 = vld [vmem:[%s14] sm:$0x1]
        %v1503 = vlaneseq
        %v1504 = vshrl.u32 %v1503, 7
        %v1505 = vsub.s32 0, %v1504
        %v1506 = vrot.slane %v1501, %v1505
        %1508 = vmatprep.subr.mxu0 0.0
        %1509 = vmatpush1.msra.mxu0 %v1485
        %1510 = vmatprep.subr.mxu0 0.0
        %1511 = vmatpush1.msra.mxu0 %v1486
        %1512 = vmatprep.subr.mxu0 0.0
        %1513 = vmatpush1.msra.mxu0 %v1487
        %1514 = vmatprep.subr.mxu0 0.0
        %1515 = vmatpush1.msra.mxu0 %v1488
        %1516 = vmatprep.subr.mxu0 0.0
        %1517 = vmatpush1.msra.mxu0 %v1489
        %1518 = vmatprep.subr.mxu0 0.0
        %1519 = vmatpush1.msra.mxu0 %v1490
        %1520 = vmatprep.subr.mxu0 0.0
        %1521 = vmatpush1.msra.mxu0 %v1491
        %1522 = vmatprep.subr.mxu0 0.0
        %1523 = vmatpush1.msra.mxu0 %v1492
        %1524 = vmatprep.subr.mxu0 0.0
        %1525 = vmatpush1.msra.mxu0 %v1493
        %1526 = vmatprep.subr.mxu0 0.0
        %1527 = vmatpush1.msra.mxu0 %v1494
        %1528 = vmatprep.subr.mxu0 0.0
        %1529 = vmatpush1.msra.mxu0 %v1495
        %1530 = vmatprep.subr.mxu0 0.0
        %1531 = vmatpush1.msra.mxu0 %v1496
        %1532 = vmatprep.subr.mxu0 0.0
        %1533 = vmatpush1.msra.mxu0 %v1497
        %1534 = vmatprep.subr.mxu0 0.0
        %1535 = vmatpush1.msra.mxu0 %v1498
        %1536 = vmatprep.subr.mxu0 0.0
        %1537 = vmatpush1.msra.mxu0 %v1499
        %1538 = vmatprep.subr.mxu0 0.0
        %1539 = vmatpush1.msra.mxu0 %v1500
        %1540 = vmatprep.subr.mxu0 0.0
        %1541 = vmatpush1.msra.mxu0 0.0
        %1542 = vmatprep.subr.mxu0 0.0
        %1543 = vmatpush1.msra.mxu0 0.0
        %1544 = vmatprep.subr.mxu0 0.0
        %1545 = vmatpush1.msra.mxu0 0.0
        %1546 = vmatprep.subr.mxu0 0.0
        %1547 = vmatpush1.msra.mxu0 0.0
        %1548 = vmatprep.subr.mxu0 0.0
        %1549 = vmatpush1.msra.mxu0 0.0
        %1550 = vmatprep.subr.mxu0 0.0
        %1551 = vmatpush1.msra.mxu0 0.0
        %1552 = vmatprep.subr.mxu0 0.0
        %1553 = vmatpush1.msra.mxu0 0.0
        %1554 = vmatprep.subr.mxu0 0.0
        %1555 = vmatpush1.msra.mxu0 0.0
        %1556 = vmatprep.subr.mxu0 0.0
        %1557 = vmatpush1.msra.mxu0 0.0
        %1558 = vmatprep.subr.mxu0 0.0
        %1559 = vmatpush1.msra.mxu0 0.0
        %1560 = vmatprep.subr.mxu0 0.0
        %1561 = vmatpush1.msra.mxu0 0.0
        %1562 = vmatprep.subr.mxu0 0.0
        %1563 = vmatpush1.msra.mxu0 0.0
        %1564 = vmatprep.subr.mxu0 0.0
        %1565 = vmatpush1.msra.mxu0 0.0
        %1566 = vmatprep.subr.mxu0 0.0
        %1567 = vmatpush1.msra.mxu0 0.0
        %1568 = vmatprep.subr.mxu0 0.0
        %1569 = vmatpush1.msra.mxu0 0.0
        %1570 = vmatprep.subr.mxu0 0.0
        %1571 = vmatpush1.msra.mxu0 0.0
        %1572 = vmatprep.mubr.f32.mxu0 0.0
        %1573 = vmatmul.mubr.f32.gmra.mrb[0].mxu0 %v1308
        %v1574 = vpop.f32.mrb[0].mxu0
        %v1575 = vadd.f32 %v1506, %v1574
        %v1576 = vpop.f32.mrb[0].mxu0
        %1577 = vmatprep.mubr.f32.mxu0 0.0
        %1578 = vmatmul.mubr.f32.gmra.mrb[0].mxu0 %v1309
        %v1579 = vpop.f32.mrb[0].mxu0
        %v1580 = vadd.f32 %v1506, %v1579
        %v1581 = vpop.f32.mrb[0].mxu0
        %1582 = vdwg.mxu0
        %v1583 = vmax.f32 %v1575, 0.0
        %v1584 = vmax.f32 %v1580, 0.0
        %v1585 = vadd.f32 %v1483, %v1583
        %v1586 = vadd.f32 %v1484, %v1584
        %1587 = vst [vmem:[%s653] sm:$0xff] %v1585
        %1588 = vst [vmem:[%s653 + $0x8] sm:$0xff] %v1586
        %s1589 = sand.u32 %s371, 1
        %s1590 = scalar_lea.sflag [#allocation4], %s1589
        %s1591 = sand.u32 %s371, 1
        %s1592 = smul.addr %s1591, 16
        %s1593 = scalar_lea.vmem [#allocation17], %s1592
        // Predicated region
        $region117: #{tpu_custom_call.1} parent=79 // pred_check
          %p1594 = pneg %p381
        $region118: #{tpu_custom_call.1} parent=79 // pred_check_branch
          %1596 = sbr.rel (%p1594) target = $region120
        $region119: #{tpu_custom_call.1} parent=79 // pred_region
          %s1598 = ssub.s32 256, 256
          %1599 = vsyncadd %s1590, %s1598
          %s1600 = smul.addr %s38, 2
          %s1601 = smul.addr %s1600, 128
          %s1602 = scalar_lea.hbm %s15, %s1601
          %s1603 = sshll.u32 %s1593, 4
          %s1604 = int_to_ptr.vmem [resolvable:$true] %s1603
          %1609 = dma.vmem_to_hbm [thread:$0]  %s1604, 256, %s1602, %s1590, 128, 128, 8
        $region120: #{tpu_custom_call.1} parent=79 // pred_fallthru
          _
      $region80: #{tpu_custom_call.1} parent=5 // pred_fallthru
        _
      %p1610 = scmp.le.s32.totalorder 2, %s33
      // Predicated region
      $region121: #{tpu_custom_call.1} parent=5 // pred_check
        %p1611 = pneg %p1610
      $region122: #{tpu_custom_call.1} parent=5 // pred_check_branch
        %1613 = sbr.rel (%p1611) target = $region124
      $region123: #{tpu_custom_call.1} parent=5 // pred_region
        %s1614 = ssub.s32 %s33, 2
        // Predicated region
        $region125: #{tpu_custom_call.1} parent=123 // pred_check
          %p1615 = pneg %p387
        $region126: #{tpu_custom_call.1} parent=123 // pred_check_branch
          %1617 = sbr.rel (%p1615) target = $region128
        $region127: #{tpu_custom_call.1} parent=123 // pred_region
          %s1618 = sand.u32 %s372, 1
          %s1619 = scalar_lea.sflag [#allocation4], %s1618
          %s1620 = sand.u32 %s372, 1
          %s1621 = smul.addr %s1620, 16
          %s1622 = scalar_lea.vmem [#allocation17], %s1621
          %1623 = dma.done %s1619, 256
        $region128: #{tpu_custom_call.1} parent=123 // pred_fallthru
          _
      $region124: #{tpu_custom_call.1} parent=5 // pred_fallthru
        _
    $region6: #{tpu_custom_call.1} parent=1 // loop_footer
      %s37 = sadd.s32 1, %s33
    $region7: #{tpu_custom_call.1} parent=1 // loop_footer_branch
      %32 = sbr.rel target = $region3
    $region8: #{tpu_custom_call.1} parent=1 // loop_exit
      _
    %1624 = vsyncpa [#allocation3], 1
    %s1625 = scalar_lea.sflag [#allocation3], 1
    %1626 = vsyncpa %s1625, 1
    %1627 = vsyncpa [#allocation6], 1
    %s1628 = scalar_lea.sflag [#allocation6], 1
    %1629 = vsyncpa %s1628, 1
    %1630 = vsyncpa [#allocation9], 1
    %1631 = vsyncpa [#allocation12], 1
    %1632 = vsyncpa [#allocation15], 1
    %1633 = vsyncpa [#allocation4], 1
    %s1634 = scalar_lea.sflag [#allocation4], 1
    %1635 = vsyncpa %s1634, 1

</llo_original>
